<compile_context>
chip_gen: v6e
topology: v6e:2x2x1
jax: 0.10.0
libtpu: 0.0.40
codegen_flags: <defaults>
</compile_context>

<pallas_src>
import functools

import jax
import jax.numpy as jnp
from jax.experimental import pallas as pl
from jax.experimental.pallas import tpu as pltpu

STEPS = 2


def _round_up(x, m):
    return (x + m - 1) // m * m


def _tpu_generation_and_vmem_budget():
    """Best-effort TPU generation -> (tag, usable VMEM budget in bytes)."""
    kind = ""
    try:
        kind = (getattr(jax.devices()[0], "device_kind", "") or "").lower()
    except Exception:
        pass
    if "v7" in kind:
        return "v7x", 48 << 20          # 64 MiB physical; leave headroom
    if "v6" in kind:
        return "v6e", 100 << 20         # 128 MiB physical
    if "v5 lite" in kind or "v5e" in kind or "v5lite" in kind:
        return "v5e", 100 << 20         # 128 MiB physical
    if "v5" in kind or "v4" in kind:    # v5p / v4: also 128 MiB VMEM
        return "v6e", 100 << 20
    return None, 64 << 20               # unknown -> conservative


def _pick_batch_tile(batch, gen, est_vmem_bytes, vmem_budget):
    """Pipeline- and generation-aware batch tile.

    v7x: among tiles giving >= 4 grid steps (>= 2 per TensorCore, so the
    pipeline can overlap DMA with compute), take the largest that fits VMEM.
    v5e/v6e: take the largest tile that fits the VMEM budget -- bigger tiles
    amortize per-grid-step overhead and automatically satisfy the
    bt*N >= 256 (v6e) / 128 (v5e) MXU row target whenever the problem allows.
    """
    min_grid = 4 if gen == "v7x" else 1
    divisors = [d for d in range(batch, 0, -1) if batch % d == 0]  # descending
    cands = [d for d in divisors if batch // d >= min_grid] or [1]
    fits = [d for d in cands if est_vmem_bytes(d) <= vmem_budget]
    return fits[0] if fits else cands[-1]


def _graph_layer_kernel(inp_ref, adj_ref, mask_ref, we_ref, w1_ref, w2_ref,
                        out_ref, *, steps, fuse_xa):
    bt, n, din = inp_ref.shape
    dout = we_ref.shape[1]
    rows = bt * n
    cd = we_ref.dtype            # MXU input dtype; accumulation is always f32

    dot = functools.partial(jnp.dot, preferred_element_type=jnp.float32)
    mm = functools.partial(jnp.einsum, "bij,bjd->bid",
                           preferred_element_type=jnp.float32)

    # In-kernel casts (no wrapper-side HBM convert pass); adjacency cast is
    # hoisted out of the steps loop and reused every step.
    inp = inp_ref[...].reshape(rows, din).astype(cd)
    adj = adj_ref[...].astype(cd)                       # (bt, n, n)
    w_enc = we_ref[...]                                 # (din, dout)
    w1 = w1_ref[...]   # fuse_xa: (dout,5*dout)=[z0|r0|h0|z1|r1]; else (dout,3*dout)=[z0|r0|h0]
    w2 = w2_ref[...]   # fuse_xa: (dout,dout)=h1;                 else (dout,3*dout)=[z1|r1|h1]

    # Hoist the (rows,1)->(rows,dout) mask broadcast out of the steps loop
    # (JAX does not CSE broadcast_in_dim).
    mask = jnp.broadcast_to(
        mask_ref[...].reshape(rows, 1).astype(jnp.float32), (rows, dout))

    # x = mask * relu(encode(inputs)).  Gating stays in f32 (works on v5e).
    # TODO(synk): on v6e/v7x the elementwise gating (sigmoid/relu/blend) could
    # run in bf16 to halve VPU/EUP cost once tiles are VPU-visible.
    x = mask * jax.nn.relu(dot(inp, w_enc))

    def step(x):
        x_cd = x.astype(cd)                             # single cast per step
        if fuse_xa:
            # N << Dout: (adj @ x) @ W == adj @ (x @ W) -> one lane-dense
            # (dout, 5*dout) matmul, then message-pass the 3*dout slab.
            xa = dot(x_cd, w1)                          # (rows, 5*dout)
            ga = mm(adj, xa[:, :3 * dout].reshape(bt, n, 3 * dout).astype(cd)
                    ).reshape(rows, 3 * dout)           # [z0|r0|h0](adj@x)
            gx = xa[:, 3 * dout:]                       # [z1|r1](x)
        else:
            a = mm(adj, x_cd.reshape(bt, n, dout)).reshape(rows, dout)
            ga = dot(a.astype(cd), w1)                  # [z0|r0|h0](a)
            gx = dot(x_cd, w2[:, :2 * dout])            # [z1|r1](x)
        # Fused z/r gate: one wide add + one sigmoid; slices 128-lane aligned.
        s = jax.nn.sigmoid(ga[:, :2 * dout] + gx)
        z = s[:, :dout]
        r = s[:, dout:]
        w_h = w2 if fuse_xa else w2[:, 2 * dout:]
        h1 = dot((x * r).astype(cd), w_h)               # (rows, dout)
        h = jax.nn.relu(mask * (ga[:, 2 * dout:] + h1))
        return x + z * (h - x)                          # == h*z + x*(1-z)

    if steps <= 4:
        for _ in range(steps):                          # short: unrolled
            x = step(x)
    else:
        # Long propagation: bound live ranges with a real loop.
        x = jax.lax.fori_loop(0, steps, lambda _, xv: step(xv), x)

    out_ref[...] = x.reshape(bt, n, dout).astype(out_ref.dtype)


def graph_layer_pallas(inputs, adj, mask, weights, *, steps=STEPS,
                       compute_dtype=jnp.bfloat16, out_dtype=jnp.float32,
                       block_b=None, fuse_xa=None):
    """GraphLayer.forward as a single Pallas kernel.

    weights: dict encode,z0,z1,r0,r1,h0,h1, each stored as (in_dim, out_dim) so
    the kernel computes x @ W (== PyTorch's x @ W.T).  compute_dtype=bf16 is
    the fast MXU path (f32 accumulation & gating); compute_dtype=f32 is the
    exact escape hatch matching the PyTorch module up to reassociation.
    out_dtype=bf16 halves output writeback if downstream accepts it.
    """
    B, N, Din = inputs.shape
    Dout = weights["encode"].shape[1]
    # Lane-dense gate slices (dout / 2*dout / 3*dout boundaries) and unmasked
    # output stores require Dout to be a multiple of 128.
    assert Dout % 128 == 0, f"Dout={Dout} must be a multiple of 128 (pad the layer)"

    cd = jnp.dtype(compute_dtype)
    out_dtype = jnp.dtype(out_dtype)
    if fuse_xa is None:
        fuse_xa = 4 * N <= Dout   # extra 2*bt*N^2*Dout einsum MACs negligible

    # Weight slabs (tiny, one-time per call): fused lane-dense panels.
    w_enc = weights["encode"].astype(cd)
    if fuse_xa:
        w1 = jnp.concatenate([weights["z0"], weights["r0"], weights["h0"],
                              weights["z1"], weights["r1"]], axis=1).astype(cd)
        w2 = weights["h1"].astype(cd)
    else:
        w1 = jnp.concatenate([weights["z0"], weights["r0"], weights["h0"]],
                             axis=1).astype(cd)
        w2 = jnp.concatenate([weights["z1"], weights["r1"], weights["h1"]],
                             axis=1).astype(cd)

    gen, vmem_budget = _tpu_generation_and_vmem_budget()

    def est_vmem_bytes(bt):
        """Rough VMEM bytes for a batch tile of bt graphs ((8,128)-padded)."""
        def blk(d2, d3, itemsize):          # one (bt, d2, d3) pipeline block
            return bt * _round_up(d2, 8) * _round_up(d3, 128) * itemsize
        pipeline = 2 * (blk(N, Din, inputs.dtype.itemsize)     # double-buffered
                        + blk(N, N, adj.dtype.itemsize)
                        + blk(N, 1, mask.dtype.itemsize)
                        + blk(N, Dout, out_dtype.itemsize))
        # Weights (double-buffered by default; constant index_map so the extra
        # copy is wasted -- TODO(synk): pipeline_mode=pl.Buffered(1) when
        # Dout >= 512 to reclaim that VMEM, mainly for v7x).
        wbytes = 2 * cd.itemsize * (w_enc.size + w1.size + w2.size)
        rows = bt * _round_up(N, 8)
        width = (5 if fuse_xa else 3) + 2 + 4   # xa/ga + gx + x/s/h/xr temporaries
        interm = rows * Dout * 4 * width + blk(N, N, cd.itemsize)
        return pipeline + wbytes + interm

    bt = block_b if block_b is not None else _pick_batch_tile(
        B, gen, est_vmem_bytes, vmem_budget)
    assert B % bt == 0, "batch tile must divide the batch size"
    grid_b = B // bt

    need = est_vmem_bytes(bt)
    if need > vmem_budget:
        # TODO(synk): stream (bt, tn, N) adjacency row-chunks (second grid axis
        # or pltpu.emit_pipeline with adj in pl.ANY) while keeping x resident in
        # VMEM scratch; required for large N on v7x (64 MiB) before v5e/v6e.
        raise ValueError(
            f"adjacency block does not fit the VMEM budget ({need >> 20} MiB > "
            f"{vmem_budget >> 20} MiB); chunk the adjacency along the node dim")
    vmem_limit = int(min(vmem_budget, max(32 << 20, need + (4 << 20))))

    kernel = functools.partial(_graph_layer_kernel, steps=steps, fuse_xa=fuse_xa)

    # Inputs / adjacency / mask go in at their native dtype and are cast
    # in-kernel: no separate HBM read+write convert pass over the dominant
    # B*N^2 adjacency stream.  TODO(synk): store adj as int8/fp8 upstream for
    # binary / quantizable graphs to further shrink that stream.
    return pl.pallas_call(
        kernel,
        out_shape=jax.ShapeDtypeStruct((B, N, Dout), out_dtype),
        grid_spec=pltpu.PrefetchScalarGridSpec(
            num_scalar_prefetch=0,
            grid=(grid_b,),
            in_specs=[
                pl.BlockSpec((bt, N, Din), lambda b: (b, 0, 0)),    # inputs
                pl.BlockSpec((bt, N, N), lambda b: (b, 0, 0)),      # adjacency
                pl.BlockSpec((bt, N, 1), lambda b: (b, 0, 0)),      # node mask
                pl.BlockSpec((Din, Dout), lambda b: (0, 0)),        # encode
                pl.BlockSpec(w1.shape, lambda b: (0, 0)),           # gate slab 1
                pl.BlockSpec(w2.shape, lambda b: (0, 0)),           # gate slab 2
            ],
            out_specs=pl.BlockSpec((bt, N, Dout), lambda b: (b, 0, 0)),
        ),
        compiler_params=pltpu.CompilerParams(
            dimension_semantics=("parallel",),
            vmem_limit_bytes=vmem_limit,
        ),
    )(inputs, adj, mask, w_enc, w1, w2)


def graph_layer_ref(inputs, adj, mask, weights, *, steps=STEPS,
                    compute_dtype=jnp.float32):
    """Pure-JAX reference matching PyTorch GraphLayer.forward (same op order).

    compute_dtype controls the dtype fed to the matmuls (accumulation stays
    f32), mirroring the kernel's precision recipe when set to bf16.
    """
    cd = compute_dtype
    dense = lambda v, w: jnp.einsum("bnk,km->bnm", v.astype(cd), w.astype(cd),
                                    preferred_element_type=jnp.float32)
    spmm = lambda A, v: jnp.einsum("bij,bjm->bim", A.astype(cd), v.astype(cd),
                                   preferred_element_type=jnp.float32)
    mask = mask.astype(jnp.float32)
    x = mask * jax.nn.relu(dense(inputs, weights["encode"]))
    for _ in range(steps):
        a = spmm(adj, x)
        z = jax.nn.sigmoid(dense(a, weights["z0"]) + dense(x, weights["z1"]))
        r = jax.nn.sigmoid(dense(a, weights["r0"]) + dense(x, weights["r1"]))
        h = jax.nn.relu(mask * (dense(a, weights["h0"]) + dense(x * r, weights["h1"])))
        x = h * z + x * (1.0 - z)
    return x


def xavier_uniform(key, fan_in, fan_out):
    # Matches torch.nn.init.xavier_uniform_ bound; stored as (in, out) so the
    # kernel can compute x @ W directly (== PyTorch's x @ W.T).
    bound = (6.0 / (fan_in + fan_out)) ** 0.5
    return jax.random.uniform(key, (fan_in, fan_out), jnp.float32, -bound, bound)


if __name__ == "__main__":
    key = jax.random.PRNGKey(0)
    # D_out = 128 keeps activations/outputs lane-dense (multiple of 128 lanes).
    B, N, Din, Dout = 4, 8, 16, 128

    k_in, k_adj, k_mask, *k_w = jax.random.split(key, 3 + 7)
    inputs = jax.random.normal(k_in, (B, N, Din), jnp.float32)
    adj = jax.random.uniform(k_adj, (B, N, N), jnp.float32)
    mask = (jax.random.uniform(k_mask, (B, N, 1)) > 0.2).astype(jnp.float32)

    weights = {
        "encode": xavier_uniform(k_w[0], Din, Dout),
        "z0": xavier_uniform(k_w[1], Dout, Dout),
        "z1": xavier_uniform(k_w[2], Dout, Dout),
        "r0": xavier_uniform(k_w[3], Dout, Dout),
        "r1": xavier_uniform(k_w[4], Dout, Dout),
        "h0": xavier_uniform(k_w[5], Dout, Dout),
        "h1": xavier_uniform(k_w[6], Dout, Dout),
    }

    ref_f32 = graph_layer_ref(inputs, adj, mask, weights)
    ref_bf16 = graph_layer_ref(inputs, adj, mask, weights, compute_dtype=jnp.bfloat16)

    # Exact f32 path, both gate-fusion variants (the fused path reassociates
    # adj@(x@W) == (adj@x)@W, hence a small f32 tolerance).
    out_f32_fused = jax.block_until_ready(graph_layer_pallas(
        inputs, adj, mask, weights, compute_dtype=jnp.float32, fuse_xa=True))
    out_f32_plain = jax.block_until_ready(graph_layer_pallas(
        inputs, adj, mask, weights, compute_dtype=jnp.float32, fuse_xa=False))
    assert out_f32_fused.shape == (B, N, Dout)
    assert jnp.allclose(out_f32_fused, ref_f32, atol=1e-3, rtol=1e-3), "f32 fused mismatch"
    assert jnp.allclose(out_f32_plain, ref_f32, atol=1e-3, rtol=1e-3), "f32 plain mismatch"

    # Default fast path: bf16 MXU inputs, f32 accumulation/gating, f32 output.
    out_bf16 = jax.block_until_ready(graph_layer_pallas(inputs, adj, mask, weights))
    assert out_bf16.shape == (B, N, Dout)
    # Checked against a precision-matched bf16 reference; tolerance also covers
    # the fused path's matmul reassociation under bf16 rounding.
    assert jnp.allclose(out_bf16, ref_bf16, atol=5e-2, rtol=5e-2), "bf16 path mismatch"

    # Optional bf16 output (halves writeback); only the final store differs.
    out_bf16_out = jax.block_until_ready(graph_layer_pallas(
        inputs, adj, mask, weights, out_dtype=jnp.bfloat16))
    assert out_bf16_out.dtype == jnp.bfloat16
    assert jnp.allclose(out_bf16_out.astype(jnp.float32), out_bf16,
                        atol=2e-2, rtol=2e-2), "bf16-output path mismatch"

    print("KERNEL_OK")
</pallas_src>

<mosaic_0001>
module attributes {stable_mosaic.version = 11 : i64} {
  func.func @_graph_layer_kernel(%arg0: i32, %arg1: memref<4x8x16xf32, #tpu.memory_space<vmem>>, %arg2: memref<4x8x8xf32, #tpu.memory_space<vmem>>, %arg3: memref<4x8x1xf32, #tpu.memory_space<vmem>>, %arg4: memref<16x128xf32, #tpu.memory_space<vmem>>, %arg5: memref<128x640xf32, #tpu.memory_space<vmem>>, %arg6: memref<128x128xf32, #tpu.memory_space<vmem>>, %arg7: memref<4x8x128xf32, #tpu.memory_space<vmem>>) attributes {dimension_semantics = [#tpu.dimension_semantics<parallel>], iteration_bounds = array<i64: 1>, scalar_prefetch = 0 : i64, scratch_operands = 0 : i64, tpu.core_type = #tpu.core_type<tc>, window_params = [{transform_indices = @transform_0, window_bounds = array<i64: 4, 8, 16>}, {transform_indices = @transform_1, window_bounds = array<i64: 4, 8, 8>}, {transform_indices = @transform_2, window_bounds = array<i64: 4, 8, 1>}, {pipeline_mode = #tpu.pipeline_mode<synchronous>, transform_indices = @transform_3, window_bounds = array<i64: 16, 128>}, {pipeline_mode = #tpu.pipeline_mode<synchronous>, transform_indices = @transform_4, window_bounds = array<i64: 128, 640>}, {pipeline_mode = #tpu.pipeline_mode<synchronous>, transform_indices = @transform_5, window_bounds = array<i64: 128, 128>}, {transform_indices = @transform_6, window_bounds = array<i64: 4, 8, 128>}]} {
    %c0 = arith.constant 0 : index
    %c0_0 = arith.constant 0 : index
    %c0_1 = arith.constant 0 : index
    %0 = vector.load %arg1[%c0, %c0_0, %c0_1] : memref<4x8x16xf32, #tpu.memory_space<vmem>>, vector<4x8x16xf32>
    %1 = vector.shape_cast %0 : vector<4x8x16xf32> to vector<32x16xf32>
    %c0_2 = arith.constant 0 : index
    %c0_3 = arith.constant 0 : index
    %c0_4 = arith.constant 0 : index
    %2 = vector.load %arg2[%c0_2, %c0_3, %c0_4] : memref<4x8x8xf32, #tpu.memory_space<vmem>>, vector<4x8x8xf32>
    %c0_5 = arith.constant 0 : index
    %c0_6 = arith.constant 0 : index
    %3 = vector.load %arg4[%c0_5, %c0_6] : memref<16x128xf32, #tpu.memory_space<vmem>>, vector<16x128xf32>
    %c0_7 = arith.constant 0 : index
    %c0_8 = arith.constant 0 : index
    %4 = vector.load %arg5[%c0_7, %c0_8] : memref<128x640xf32, #tpu.memory_space<vmem>>, vector<128x640xf32>
    %c0_9 = arith.constant 0 : index
    %c0_10 = arith.constant 0 : index
    %5 = vector.load %arg6[%c0_9, %c0_10] : memref<128x128xf32, #tpu.memory_space<vmem>>, vector<128x128xf32>
    %c0_11 = arith.constant 0 : index
    %c0_12 = arith.constant 0 : index
    %c0_13 = arith.constant 0 : index
    %6 = vector.load %arg3[%c0_11, %c0_12, %c0_13] : memref<4x8x1xf32, #tpu.memory_space<vmem>>, vector<4x8x1xf32>
    %7 = vector.shape_cast %6 : vector<4x8x1xf32> to vector<32x1xf32>
    %8 = vector.shape_cast %7 : vector<32x1xf32> to vector<32x1xf32>
    %9 = vector.broadcast %8 : vector<32x1xf32> to vector<32x128xf32>
    %cst = arith.constant dense<0.000000e+00> : vector<32x128xf32>
    %10 = tpu.matmul %1, %3, %cst {dimension_numbers = #tpu.dot_dimension_numbers<[1], [0], [0], [1], [0, 0, 1, 1], [], []>} : vector<32x16xf32>, vector<16x128xf32>, vector<32x128xf32> -> vector<32x128xf32>
    %cst_14 = arith.constant 0.000000e+00 : f32
    %11 = vector.broadcast %cst_14 : f32 to vector<32x128xf32>
    %12 = arith.maximumf %10, %11 : vector<32x128xf32>
    %13 = arith.mulf %9, %12 : vector<32x128xf32>
    %cst_15 = arith.constant dense<0.000000e+00> : vector<32x640xf32>
    %14 = tpu.matmul %13, %4, %cst_15 {dimension_numbers = #tpu.dot_dimension_numbers<[1], [0], [0], [1], [0, 0, 1, 1], [], []>} : vector<32x128xf32>, vector<128x640xf32>, vector<32x640xf32> -> vector<32x640xf32>
    %15 = vector.extract_strided_slice %14 {offsets = [0, 0], sizes = [32, 384], strides = [1, 1]} : vector<32x640xf32> to vector<32x384xf32>
    %16 = vector.shape_cast %15 : vector<32x384xf32> to vector<4x8x384xf32>
    "tpu.trace_start"() <{level = 10 : i32, message = "bij,bjd->bid"}> : () -> ()
    %cst_16 = arith.constant dense<0.000000e+00> : vector<4x8x384xf32>
    %17 = tpu.matmul %2, %16, %cst_16 {dimension_numbers = #tpu.dot_dimension_numbers<[2], [1], [1], [2], [0, 0, 0, 1, 1, 2], [0], [0]>} : vector<4x8x8xf32>, vector<4x8x384xf32>, vector<4x8x384xf32> -> vector<4x8x384xf32>
    "tpu.trace_stop"() : () -> ()
    %18 = vector.shape_cast %17 : vector<4x8x384xf32> to vector<32x384xf32>
    %19 = vector.extract_strided_slice %14 {offsets = [0, 384], sizes = [32, 256], strides = [1, 1]} : vector<32x640xf32> to vector<32x256xf32>
    %20 = vector.extract_strided_slice %18 {offsets = [0, 0], sizes = [32, 256], strides = [1, 1]} : vector<32x384xf32> to vector<32x256xf32>
    %21 = arith.addf %20, %19 : vector<32x256xf32>
    %22 = arith.negf %21 : vector<32x256xf32>
    %23 = math.exp %22 : vector<32x256xf32>
    %cst_17 = arith.constant 1.000000e+00 : f32
    %24 = vector.broadcast %cst_17 : f32 to vector<32x256xf32>
    %25 = arith.addf %24, %23 : vector<32x256xf32>
    %26 = arith.divf %24, %25 : vector<32x256xf32>
    %27 = vector.extract_strided_slice %26 {offsets = [0, 0], sizes = [32, 128], strides = [1, 1]} : vector<32x256xf32> to vector<32x128xf32>
    %28 = vector.extract_strided_slice %26 {offsets = [0, 128], sizes = [32, 128], strides = [1, 1]} : vector<32x256xf32> to vector<32x128xf32>
    %29 = arith.mulf %13, %28 : vector<32x128xf32>
    %cst_18 = arith.constant dense<0.000000e+00> : vector<32x128xf32>
    %30 = tpu.matmul %29, %5, %cst_18 {dimension_numbers = #tpu.dot_dimension_numbers<[1], [0], [0], [1], [0, 0, 1, 1], [], []>} : vector<32x128xf32>, vector<128x128xf32>, vector<32x128xf32> -> vector<32x128xf32>
    %31 = vector.extract_strided_slice %18 {offsets = [0, 256], sizes = [32, 128], strides = [1, 1]} : vector<32x384xf32> to vector<32x128xf32>
    %32 = arith.addf %31, %30 : vector<32x128xf32>
    %33 = arith.mulf %9, %32 : vector<32x128xf32>
    %cst_19 = arith.constant 0.000000e+00 : f32
    %34 = vector.broadcast %cst_19 : f32 to vector<32x128xf32>
    %35 = arith.maximumf %33, %34 : vector<32x128xf32>
    %36 = arith.subf %35, %13 : vector<32x128xf32>
    %37 = arith.mulf %27, %36 : vector<32x128xf32>
    %38 = arith.addf %13, %37 : vector<32x128xf32>
    %cst_20 = arith.constant dense<0.000000e+00> : vector<32x640xf32>
    %39 = tpu.matmul %38, %4, %cst_20 {dimension_numbers = #tpu.dot_dimension_numbers<[1], [0], [0], [1], [0, 0, 1, 1], [], []>} : vector<32x128xf32>, vector<128x640xf32>, vector<32x640xf32> -> vector<32x640xf32>
    %40 = vector.extract_strided_slice %39 {offsets = [0, 0], sizes = [32, 384], strides = [1, 1]} : vector<32x640xf32> to vector<32x384xf32>
    %41 = vector.shape_cast %40 : vector<32x384xf32> to vector<4x8x384xf32>
    "tpu.trace_start"() <{level = 10 : i32, message = "bij,bjd->bid"}> : () -> ()
    %cst_21 = arith.constant dense<0.000000e+00> : vector<4x8x384xf32>
    %42 = tpu.matmul %2, %41, %cst_21 {dimension_numbers = #tpu.dot_dimension_numbers<[2], [1], [1], [2], [0, 0, 0, 1, 1, 2], [0], [0]>} : vector<4x8x8xf32>, vector<4x8x384xf32>, vector<4x8x384xf32> -> vector<4x8x384xf32>
    "tpu.trace_stop"() : () -> ()
    %43 = vector.shape_cast %42 : vector<4x8x384xf32> to vector<32x384xf32>
    %44 = vector.extract_strided_slice %39 {offsets = [0, 384], sizes = [32, 256], strides = [1, 1]} : vector<32x640xf32> to vector<32x256xf32>
    %45 = vector.extract_strided_slice %43 {offsets = [0, 0], sizes = [32, 256], strides = [1, 1]} : vector<32x384xf32> to vector<32x256xf32>
    %46 = arith.addf %45, %44 : vector<32x256xf32>
    %47 = arith.negf %46 : vector<32x256xf32>
    %48 = math.exp %47 : vector<32x256xf32>
    %cst_22 = arith.constant 1.000000e+00 : f32
    %49 = vector.broadcast %cst_22 : f32 to vector<32x256xf32>
    %50 = arith.addf %49, %48 : vector<32x256xf32>
    %51 = arith.divf %49, %50 : vector<32x256xf32>
    %52 = vector.extract_strided_slice %51 {offsets = [0, 0], sizes = [32, 128], strides = [1, 1]} : vector<32x256xf32> to vector<32x128xf32>
    %53 = vector.extract_strided_slice %51 {offsets = [0, 128], sizes = [32, 128], strides = [1, 1]} : vector<32x256xf32> to vector<32x128xf32>
    %54 = arith.mulf %38, %53 : vector<32x128xf32>
    %cst_23 = arith.constant dense<0.000000e+00> : vector<32x128xf32>
    %55 = tpu.matmul %54, %5, %cst_23 {dimension_numbers = #tpu.dot_dimension_numbers<[1], [0], [0], [1], [0, 0, 1, 1], [], []>} : vector<32x128xf32>, vector<128x128xf32>, vector<32x128xf32> -> vector<32x128xf32>
    %56 = vector.extract_strided_slice %43 {offsets = [0, 256], sizes = [32, 128], strides = [1, 1]} : vector<32x384xf32> to vector<32x128xf32>
    %57 = arith.addf %56, %55 : vector<32x128xf32>
    %58 = arith.mulf %9, %57 : vector<32x128xf32>
    %cst_24 = arith.constant 0.000000e+00 : f32
    %59 = vector.broadcast %cst_24 : f32 to vector<32x128xf32>
    %60 = arith.maximumf %58, %59 : vector<32x128xf32>
    %61 = arith.subf %60, %38 : vector<32x128xf32>
    %62 = arith.mulf %52, %61 : vector<32x128xf32>
    %63 = arith.addf %38, %62 : vector<32x128xf32>
    %64 = vector.shape_cast %63 : vector<32x128xf32> to vector<4x8x128xf32>
    %c0_25 = arith.constant 0 : index
    %c0_26 = arith.constant 0 : index
    %c0_27 = arith.constant 0 : index
    %65 = vector.load %arg7[%c0_25, %c0_26, %c0_27] : memref<4x8x128xf32, #tpu.memory_space<vmem>>, vector<4x8x128xf32>
    tpu.vector_store %arg7[%c0_25, %c0_26, %c0_27], %64 {strides = array<i32>} : memref<4x8x128xf32, #tpu.memory_space<vmem>>, vector<4x8x128xf32>,
    return
  }
  func.func @transform_0(%arg0: i32) -> (i32, i32, i32) {
    %c0_i32 = arith.constant 0 : i32
    %c0_i32_0 = arith.constant 0 : i32
    %c0_i32_1 = arith.constant 0 : i32
    return %arg0, %c0_i32, %c0_i32_0 : i32, i32, i32
  }
  func.func @transform_1(%arg0: i32) -> (i32, i32, i32) {
    %c0_i32 = arith.constant 0 : i32
    %c0_i32_0 = arith.constant 0 : i32
    %c0_i32_1 = arith.constant 0 : i32
    return %arg0, %c0_i32, %c0_i32_0 : i32, i32, i32
  }
  func.func @transform_2(%arg0: i32) -> (i32, i32, i32) {
    %c0_i32 = arith.constant 0 : i32
    %c0_i32_0 = arith.constant 0 : i32
    %c0_i32_1 = arith.constant 0 : i32
    return %arg0, %c0_i32, %c0_i32_0 : i32, i32, i32
  }
  func.func @transform_3(%arg0: i32) -> (i32, i32) {
    %c0_i32 = arith.constant 0 : i32
    %c0_i32_0 = arith.constant 0 : i32
    %c0_i32_1 = arith.constant 0 : i32
    return %c0_i32, %c0_i32_0 : i32, i32
  }
  func.func @transform_4(%arg0: i32) -> (i32, i32) {
    %c0_i32 = arith.constant 0 : i32
    %c0_i32_0 = arith.constant 0 : i32
    %c0_i32_1 = arith.constant 0 : i32
    return %c0_i32, %c0_i32_0 : i32, i32
  }
  func.func @transform_5(%arg0: i32) -> (i32, i32) {
    %c0_i32 = arith.constant 0 : i32
    %c0_i32_0 = arith.constant 0 : i32
    %c0_i32_1 = arith.constant 0 : i32
    return %c0_i32, %c0_i32_0 : i32, i32
  }
  func.func @transform_6(%arg0: i32) -> (i32, i32, i32) {
    %c0_i32 = arith.constant 0 : i32
    %c0_i32_0 = arith.constant 0 : i32
    %c0_i32_1 = arith.constant 0 : i32
    return %arg0, %c0_i32, %c0_i32_0 : i32, i32, i32
  }
}

</mosaic_0001>

<llo_original>
// kernel: tpu_custom_call.1
$region0: #{tpu_custom_call.1}
  #allocation0 [shape = 'u32[]', space=smem, size = 0x4, offset = 0x4, fixed_abs, tag = 'smem constant byte address 0x4 - core index']
  #allocation1 [shape = 'u32[144,128]{1,0:T(1,128)}', space=vmem, size = 0x12000, scoped, tag = 'internal scratch']
  %s0 = inlined_call_operand.vmem [shape: f32[4,8,16], index: 0, kind: input, shape index: {}]
  %s1 = inlined_call_operand.hbm [shape: f32[4,8,8], index: 1, kind: input, shape index: {}]
  %s2 = inlined_call_operand.vmem [shape: f32[4,8,1], index: 2, kind: input, shape index: {}]
  %s3 = inlined_call_operand.hbm [shape: f32[16,128], index: 3, kind: input, shape index: {}]
  %s4 = inlined_call_operand.hbm [shape: f32[128,640], index: 4, kind: input, shape index: {}]
  %s5 = inlined_call_operand.hbm [shape: f32[128,128], index: 5, kind: input, shape index: {}]
  %s6 = inlined_call_operand.hbm [shape: f32[4,8,128], index: 6, kind: output, shape index: {}]
  %s7 = sld [smem:[#allocation0]]
  $region50: #{tpu_custom_call.1} parent=0
    _
  %s9 = ssub.s32 1, %s7
  %s10 = scalar_select 0, %s9, %s7
  $region1: #{tpu_custom_call.1} parent=0
    #allocation2 [shape = 'u8[16384]{0}', space=vmem, size = 0x4000, scoped, tag = 'input window, operand 1, single buffered']
    #allocation3 [shape = 's32[1]{0}', space=sflag, size = 0x4, scoped, tag = 'scoped memory for tpu_custom_call.1']
    #allocation4 [shape = 's32[1]{0}', space=sflag, size = 0x4, scoped, tag = 'scoped memory for tpu_custom_call.1']
    #allocation5 [shape = 'u8[8192]{0}', space=vmem, size = 0x2000, scoped, tag = 'input window, operand 3, single buffered']
    #allocation6 [shape = 's32[1]{0}', space=sflag, size = 0x4, scoped, tag = 'scoped memory for tpu_custom_call.1']
    #allocation7 [shape = 'u8[327680]{0}', space=vmem, size = 0x50000, scoped, tag = 'input window, operand 4, single buffered']
    #allocation8 [shape = 'u8[65536]{0}', space=vmem, size = 0x10000, scoped, tag = 'input window, operand 5, single buffered']
    #allocation9 [shape = 's32[1]{0}', space=sflag, size = 0x4, scoped, tag = 'scoped memory for tpu_custom_call.1']
    #allocation10 [shape = 'u8[16384]{0}', space=vmem, size = 0x4000, scoped, tag = 'output window, operand 0, single buffered']
    %11 = vsyncpa [#allocation3], 0
    %12 = vsyncpa [#allocation6], 0
    %13 = vsyncpa [#allocation9], 0
    %14 = vsyncpa [#allocation4], 0
    // Predicated region
    $region2: #{tpu_custom_call.1} parent=1 // pred_check
      _
    $region3: #{tpu_custom_call.1} parent=1 // pred_check_branch
      %16 = sbr.rel (0) target = $region5
    $region4: #{tpu_custom_call.1} parent=1 // pred_region
      _
    $region5: #{tpu_custom_call.1} parent=1 // pred_fallthru
      _
    // Predicated region
    $region6: #{tpu_custom_call.1} parent=1 // pred_check
      _
    $region7: #{tpu_custom_call.1} parent=1 // pred_check_branch
      %18 = sbr.rel (0) target = $region9
    $region8: #{tpu_custom_call.1} parent=1 // pred_region
      %s20 = ssub.s32 512, 512
      %21 = vsyncadd [#allocation3], %s20
      %s22 = sshll.u32 [#allocation2], 4
      %s23 = int_to_ptr.vmem [resolvable:$true] %s22
      %28 = dma.hbm_to_vmem [thread:$0]  %s1, 512, %s23, [#allocation3], 128, 128, 8
    $region9: #{tpu_custom_call.1} parent=1 // pred_fallthru
      _
    // Predicated region
    $region10: #{tpu_custom_call.1} parent=1 // pred_check
      _
    $region11: #{tpu_custom_call.1} parent=1 // pred_check_branch
      %30 = sbr.rel (0) target = $region13
    $region12: #{tpu_custom_call.1} parent=1 // pred_region
      _
    $region13: #{tpu_custom_call.1} parent=1 // pred_fallthru
      _
    // Predicated region
    $region14: #{tpu_custom_call.1} parent=1 // pred_check
      _
    $region15: #{tpu_custom_call.1} parent=1 // pred_check_branch
      %32 = sbr.rel (0) target = $region17
    $region16: #{tpu_custom_call.1} parent=1 // pred_region
      %s34 = ssub.s32 256, 256
      %35 = vsyncadd [#allocation6], %s34
      %s36 = sshll.u32 [#allocation5], 4
      %s37 = int_to_ptr.vmem [resolvable:$true] %s36
      %42 = dma.hbm_to_vmem [thread:$0]  %s3, 256, %s37, [#allocation6], 128, 128, 8
    $region17: #{tpu_custom_call.1} parent=1 // pred_fallthru
      _
    // Predicated region
    $region18: #{tpu_custom_call.1} parent=1 // pred_check
      _
    $region19: #{tpu_custom_call.1} parent=1 // pred_check_branch
      %44 = sbr.rel (0) target = $region21
    $region20: #{tpu_custom_call.1} parent=1 // pred_region
      %s46 = ssub.s32 10240, 10240
      %47 = vsyncadd [#allocation6], %s46
      %s48 = sshll.u32 [#allocation7], 4
      %s49 = int_to_ptr.vmem [resolvable:$true] %s48
      %54 = dma.hbm_to_vmem [thread:$0]  %s4, 10240, %s49, [#allocation6], 640, 640, 40
    $region21: #{tpu_custom_call.1} parent=1 // pred_fallthru
      _
    // Predicated region
    $region22: #{tpu_custom_call.1} parent=1 // pred_check
      _
    $region23: #{tpu_custom_call.1} parent=1 // pred_check_branch
      %56 = sbr.rel (0) target = $region25
    $region24: #{tpu_custom_call.1} parent=1 // pred_region
      %s58 = ssub.s32 2048, 2048
      %59 = vsyncadd [#allocation9], %s58
      %s60 = sshll.u32 [#allocation8], 4
      %s61 = int_to_ptr.vmem [resolvable:$true] %s60
      %66 = dma.hbm_to_vmem [thread:$0]  %s5, 2048, %s61, [#allocation9], 128, 128, 8
    $region25: #{tpu_custom_call.1} parent=1 // pred_fallthru
      _
    // Predicated region
    $region26: #{tpu_custom_call.1} parent=1 // pred_check
      _
    $region27: #{tpu_custom_call.1} parent=1 // pred_check_branch
      %68 = sbr.rel (0) target = $region29
    $region28: #{tpu_custom_call.1} parent=1 // pred_region
      %69 = dma.done [#allocation3], 512
    $region29: #{tpu_custom_call.1} parent=1 // pred_fallthru
      _
    // Predicated region
    $region30: #{tpu_custom_call.1} parent=1 // pred_check
      _
    $region31: #{tpu_custom_call.1} parent=1 // pred_check_branch
      %71 = sbr.rel (0) target = $region33
    $region32: #{tpu_custom_call.1} parent=1 // pred_region
      %72 = dma.done [#allocation6], 256
    $region33: #{tpu_custom_call.1} parent=1 // pred_fallthru
      _
    // Predicated region
    $region34: #{tpu_custom_call.1} parent=1 // pred_check
      _
    $region35: #{tpu_custom_call.1} parent=1 // pred_check_branch
      %74 = sbr.rel (0) target = $region37
    $region36: #{tpu_custom_call.1} parent=1 // pred_region
      %75 = dma.done [#allocation6], 10240
    $region37: #{tpu_custom_call.1} parent=1 // pred_fallthru
      _
    // Predicated region
    $region38: #{tpu_custom_call.1} parent=1 // pred_check
      _
    $region39: #{tpu_custom_call.1} parent=1 // pred_check_branch
      %77 = sbr.rel (0) target = $region41
    $region40: #{tpu_custom_call.1} parent=1 // pred_region
      %78 = dma.done [#allocation9], 2048
    $region41: #{tpu_custom_call.1} parent=1 // pred_fallthru
      _
    %v79 = vld [vmem:[%s0] sm:$0xff]
    %v80 = vld [vmem:[%s0 + $0x8] sm:$0xff]
    %v81 = vld [vmem:[%s0 + $0x10] sm:$0xff]
    %v82 = vld [vmem:[%s0 + $0x18] sm:$0xff]
    %v83 = vld [vmem:[#allocation2] sm:$0xff]
    %v84 = vld [vmem:[#allocation2 + $0x8] sm:$0xff]
    %v85 = vld [vmem:[#allocation2 + $0x10] sm:$0xff]
    %v86 = vld [vmem:[#allocation2 + $0x18] sm:$0xff]
    %v87 = vld [vmem:[#allocation5] sm:$0xff]
    %v88 = vld [vmem:[#allocation5 + $0x8] sm:$0xff]
    %v89 = vld [vmem:[#allocation7] sm:$0xff]
    %v90 = vld [vmem:[#allocation7 + $0x8] sm:$0xff]
    %v91 = vld [vmem:[#allocation7 + $0x10] sm:$0xff]
    %v92 = vld [vmem:[#allocation7 + $0x18] sm:$0xff]
    %v93 = vld [vmem:[#allocation7 + $0x20] sm:$0xff]
    %v94 = vld [vmem:[#allocation7 + $0x28] sm:$0xff]
    %v95 = vld [vmem:[#allocation7 + $0x30] sm:$0xff]
    %v96 = vld [vmem:[#allocation7 + $0x38] sm:$0xff]
    %v97 = vld [vmem:[#allocation7 + $0x40] sm:$0xff]
    %v98 = vld [vmem:[#allocation7 + $0x48] sm:$0xff]
    %v99 = vld [vmem:[#allocation7 + $0x50] sm:$0xff]
    %v100 = vld [vmem:[#allocation7 + $0x58] sm:$0xff]
    %v101 = vld [vmem:[#allocation7 + $0x60] sm:$0xff]
    %v102 = vld [vmem:[#allocation7 + $0x68] sm:$0xff]
    %v103 = vld [vmem:[#allocation7 + $0x70] sm:$0xff]
    %v104 = vld [vmem:[#allocation7 + $0x78] sm:$0xff]
    %v105 = vld [vmem:[#allocation7 + $0x80] sm:$0xff]
    %v106 = vld [vmem:[#allocation7 + $0x88] sm:$0xff]
    %v107 = vld [vmem:[#allocation7 + $0x90] sm:$0xff]
    %v108 = vld [vmem:[#allocation7 + $0x98] sm:$0xff]
    %v109 = vld [vmem:[#allocation7 + $0xa0] sm:$0xff]
    %v110 = vld [vmem:[#allocation7 + $0xa8] sm:$0xff]
    %v111 = vld [vmem:[#allocation7 + $0xb0] sm:$0xff]
    %v112 = vld [vmem:[#allocation7 + $0xb8] sm:$0xff]
    %v113 = vld [vmem:[#allocation7 + $0xc0] sm:$0xff]
    %v114 = vld [vmem:[#allocation7 + $0xc8] sm:$0xff]
    %v115 = vld [vmem:[#allocation7 + $0xd0] sm:$0xff]
    %v116 = vld [vmem:[#allocation7 + $0xd8] sm:$0xff]
    %v117 = vld [vmem:[#allocation7 + $0xe0] sm:$0xff]
    %v118 = vld [vmem:[#allocation7 + $0xe8] sm:$0xff]
    %v119 = vld [vmem:[#allocation7 + $0xf0] sm:$0xff]
    %v120 = vld [vmem:[#allocation7 + $0xf8] sm:$0xff]
    %v121 = vld [vmem:[#allocation7 + $0x100] sm:$0xff]
    %v122 = vld [vmem:[#allocation7 + $0x108] sm:$0xff]
    %v123 = vld [vmem:[#allocation7 + $0x110] sm:$0xff]
    %v124 = vld [vmem:[#allocation7 + $0x118] sm:$0xff]
    %v125 = vld [vmem:[#allocation7 + $0x120] sm:$0xff]
    %v126 = vld [vmem:[#allocation7 + $0x128] sm:$0xff]
    %v127 = vld [vmem:[#allocation7 + $0x130] sm:$0xff]
    %v128 = vld [vmem:[#allocation7 + $0x138] sm:$0xff]
    %v129 = vld [vmem:[#allocation7 + $0x140] sm:$0xff]
    %v130 = vld [vmem:[#allocation7 + $0x148] sm:$0xff]
    %v131 = vld [vmem:[#allocation7 + $0x150] sm:$0xff]
    %v132 = vld [vmem:[#allocation7 + $0x158] sm:$0xff]
    %v133 = vld [vmem:[#allocation7 + $0x160] sm:$0xff]
    %v134 = vld [vmem:[#allocation7 + $0x168] sm:$0xff]
    %v135 = vld [vmem:[#allocation7 + $0x170] sm:$0xff]
    %v136 = vld [vmem:[#allocation7 + $0x178] sm:$0xff]
    %v137 = vld [vmem:[#allocation7 + $0x180] sm:$0xff]
    %v138 = vld [vmem:[#allocation7 + $0x188] sm:$0xff]
    %v139 = vld [vmem:[#allocation7 + $0x190] sm:$0xff]
    %v140 = vld [vmem:[#allocation7 + $0x198] sm:$0xff]
    %v141 = vld [vmem:[#allocation7 + $0x1a0] sm:$0xff]
    %v142 = vld [vmem:[#allocation7 + $0x1a8] sm:$0xff]
    %v143 = vld [vmem:[#allocation7 + $0x1b0] sm:$0xff]
    %v144 = vld [vmem:[#allocation7 + $0x1b8] sm:$0xff]
    %v145 = vld [vmem:[#allocation7 + $0x1c0] sm:$0xff]
    %v146 = vld [vmem:[#allocation7 + $0x1c8] sm:$0xff]
    %v147 = vld [vmem:[#allocation7 + $0x1d0] sm:$0xff]
    %v148 = vld [vmem:[#allocation7 + $0x1d8] sm:$0xff]
    %v149 = vld [vmem:[#allocation7 + $0x1e0] sm:$0xff]
    %v150 = vld [vmem:[#allocation7 + $0x1e8] sm:$0xff]
    %v151 = vld [vmem:[#allocation7 + $0x1f0] sm:$0xff]
    %v152 = vld [vmem:[#allocation7 + $0x1f8] sm:$0xff]
    %v153 = vld [vmem:[#allocation7 + $0x200] sm:$0xff]
    %v154 = vld [vmem:[#allocation7 + $0x208] sm:$0xff]
    %v155 = vld [vmem:[#allocation7 + $0x210] sm:$0xff]
    %v156 = vld [vmem:[#allocation7 + $0x218] sm:$0xff]
    %v157 = vld [vmem:[#allocation7 + $0x220] sm:$0xff]
    %v158 = vld [vmem:[#allocation7 + $0x228] sm:$0xff]
    %v159 = vld [vmem:[#allocation7 + $0x230] sm:$0xff]
    %v160 = vld [vmem:[#allocation7 + $0x238] sm:$0xff]
    %v161 = vld [vmem:[#allocation7 + $0x240] sm:$0xff]
    %v162 = vld [vmem:[#allocation7 + $0x248] sm:$0xff]
    %v163 = vld [vmem:[#allocation7 + $0x250] sm:$0xff]
    %v164 = vld [vmem:[#allocation7 + $0x258] sm:$0xff]
    %v165 = vld [vmem:[#allocation7 + $0x260] sm:$0xff]
    %v166 = vld [vmem:[#allocation7 + $0x268] sm:$0xff]
    %v167 = vld [vmem:[#allocation7 + $0x270] sm:$0xff]
    %v168 = vld [vmem:[#allocation7 + $0x278] sm:$0xff]
    %v169 = vld [vmem:[#allocation8] sm:$0xff]
    %v170 = vld [vmem:[#allocation8 + $0x8] sm:$0xff]
    %v171 = vld [vmem:[#allocation8 + $0x10] sm:$0xff]
    %v172 = vld [vmem:[#allocation8 + $0x18] sm:$0xff]
    %v173 = vld [vmem:[#allocation8 + $0x20] sm:$0xff]
    %v174 = vld [vmem:[#allocation8 + $0x28] sm:$0xff]
    %v175 = vld [vmem:[#allocation8 + $0x30] sm:$0xff]
    %v176 = vld [vmem:[#allocation8 + $0x38] sm:$0xff]
    %v177 = vld [vmem:[#allocation8 + $0x40] sm:$0xff]
    %v178 = vld [vmem:[#allocation8 + $0x48] sm:$0xff]
    %v179 = vld [vmem:[#allocation8 + $0x50] sm:$0xff]
    %v180 = vld [vmem:[#allocation8 + $0x58] sm:$0xff]
    %v181 = vld [vmem:[#allocation8 + $0x60] sm:$0xff]
    %v182 = vld [vmem:[#allocation8 + $0x68] sm:$0xff]
    %v183 = vld [vmem:[#allocation8 + $0x70] sm:$0xff]
    %v184 = vld [vmem:[#allocation8 + $0x78] sm:$0xff]
    %v185 = vld [vmem:[%s2] sm:$0xff]
    %v186 = vld [vmem:[%s2 + $0x8] sm:$0xff]
    %v187 = vld [vmem:[%s2 + $0x10] sm:$0xff]
    %v188 = vld [vmem:[%s2 + $0x18] sm:$0xff]
    %190 = vset.pattern.permute.xlu0 0
    %191 = vperm.xlu0 %190, %v185
    %v192 = vpop.permute.xlu0 %191
    %195 = vset.pattern.permute.xlu0 0
    %196 = vperm.xlu0 %195, %v186
    %v197 = vpop.permute.xlu0 %196
    %200 = vset.pattern.permute.xlu0 0
    %201 = vperm.xlu0 %200, %v187
    %v202 = vpop.permute.xlu0 %201
    %205 = vset.pattern.permute.xlu0 0
    %206 = vperm.xlu0 %205, %v188
    %v207 = vpop.permute.xlu0 %206
    %vm209 = vcmask 130048
    %v211 = vsel %vm209, %v79, 0
    %v214 = vsel %vm209, %v80, 0
    %v217 = vsel %vm209, %v81, 0
    %v220 = vsel %vm209, %v82, 0
    %222 = vmatprep.subr.mxu0 0.0
    %223 = vmatpush1.msra.mxu0 0.0
    %224 = vmatprep.subr.mxu0 0.0
    %225 = vmatpush1.msra.mxu0 0.0
    %226 = vmatprep.subr.mxu0 0.0
    %227 = vmatpush1.msra.mxu0 0.0
    %228 = vmatprep.subr.mxu0 0.0
    %229 = vmatpush1.msra.mxu0 0.0
    %230 = vmatprep.subr.mxu0 0.0
    %231 = vmatpush1.msra.mxu0 0.0
    %232 = vmatprep.subr.mxu0 0.0
    %233 = vmatpush1.msra.mxu0 0.0
    %234 = vmatprep.subr.mxu0 0.0
    %235 = vmatpush1.msra.mxu0 0.0
    %236 = vmatprep.subr.mxu0 0.0
    %237 = vmatpush1.msra.mxu0 0.0
    %238 = vmatprep.subr.mxu0 0.0
    %239 = vmatpush1.msra.mxu0 0.0
    %240 = vmatprep.subr.mxu0 0.0
    %241 = vmatpush1.msra.mxu0 0.0
    %242 = vmatprep.subr.mxu0 0.0
    %243 = vmatpush1.msra.mxu0 0.0
    %244 = vmatprep.subr.mxu0 0.0
    %245 = vmatpush1.msra.mxu0 0.0
    %246 = vmatprep.subr.mxu0 0.0
    %247 = vmatpush1.msra.mxu0 0.0
    %248 = vmatprep.subr.mxu0 0.0
    %249 = vmatpush1.msra.mxu0 0.0
    %250 = vmatprep.subr.mxu0 0.0
    %251 = vmatpush1.msra.mxu0 %v88
    %252 = vmatprep.subr.mxu0 0.0
    %253 = vmatpush1.msra.mxu0 %v87
    %254 = vmatprep.subr.mxu0 0.0
    %255 = vmatpush2.msra.mxu0 0.0
    %256 = vmatprep.subr.mxu0 0.0
    %257 = vmatpush2.msra.mxu0 0.0
    %258 = vmatprep.subr.mxu0 0.0
    %259 = vmatpush2.msra.mxu0 0.0
    %260 = vmatprep.subr.mxu0 0.0
    %261 = vmatpush2.msra.mxu0 0.0
    %262 = vmatprep.subr.mxu0 0.0
    %263 = vmatpush2.msra.mxu0 0.0
    %264 = vmatprep.subr.mxu0 0.0
    %265 = vmatpush2.msra.mxu0 0.0
    %266 = vmatprep.subr.mxu0 0.0
    %267 = vmatpush2.msra.mxu0 0.0
    %268 = vmatprep.subr.mxu0 0.0
    %269 = vmatpush2.msra.mxu0 0.0
    %270 = vmatprep.subr.mxu0 0.0
    %271 = vmatpush2.msra.mxu0 0.0
    %272 = vmatprep.subr.mxu0 0.0
    %273 = vmatpush2.msra.mxu0 0.0
    %274 = vmatprep.subr.mxu0 0.0
    %275 = vmatpush2.msra.mxu0 0.0
    %276 = vmatprep.subr.mxu0 0.0
    %277 = vmatpush2.msra.mxu0 0.0
    %278 = vmatprep.subr.mxu0 0.0
    %279 = vmatpush2.msra.mxu0 0.0
    %280 = vmatprep.subr.mxu0 0.0
    %281 = vmatpush2.msra.mxu0 0.0
    %282 = vmatprep.subr.mxu0 0.0
    %283 = vmatpush2.msra.mxu0 0.0
    %284 = vmatprep.subr.mxu0 0.0
    %285 = vmatpush2.msra.mxu0 0.0
    %286 = vmatprep.mubr.f32.mxu0 0.0
    %287 = vmatmul.mubr.f32.gmra.mxu0 %v211
    %v288 = vpop.f32.mrf.mxu0
    %v289 = vadd.f32 0.0, %v288
    %v290 = vpop.f32.mrf.mxu0
    %291 = vmatprep.mubr.f32.mxu0 0.0
    %292 = vmatmul.mubr.f32.gmra.mxu0 %v214
    %v293 = vpop.f32.mrf.mxu0
    %v294 = vadd.f32 0.0, %v293
    %v295 = vpop.f32.mrf.mxu0
    %296 = vmatprep.mubr.f32.mxu0 0.0
    %297 = vmatmul.mubr.f32.gmra.mxu0 %v217
    %v298 = vpop.f32.mrf.mxu0
    %v299 = vadd.f32 0.0, %v298
    %v300 = vpop.f32.mrf.mxu0
    %301 = vmatprep.mubr.f32.mxu0 0.0
    %302 = vmatmul.mubr.f32.gmra.mxu0 %v220
    %v303 = vpop.f32.mrf.mxu0
    %v304 = vadd.f32 0.0, %v303
    %v305 = vpop.f32.mrf.mxu0
    %306 = vdwg.mxu0
    %v307 = vmax.f32 %v289, 0.0
    %v308 = vmax.f32 %v294, 0.0
    %v309 = vmax.f32 %v299, 0.0
    %v310 = vmax.f32 %v304, 0.0
    %v311 = vmul.f32 %v192, %v307
    %v312 = vmul.f32 %v197, %v308
    %v313 = vmul.f32 %v202, %v309
    %v314 = vmul.f32 %v207, %v310
    %315 = vmatprep.subr.mxu0 %v165
    %316 = vmatpush1.msra.mxu0 %v164
    %317 = vmatprep.subr.mxu0 %v160
    %318 = vmatpush1.msra.mxu0 %v159
    %319 = vmatprep.subr.mxu0 %v155
    %320 = vmatpush1.msra.mxu0 %v154
    %321 = vmatprep.subr.mxu0 %v150
    %322 = vmatpush1.msra.mxu0 %v149
    %323 = vmatprep.subr.mxu0 %v145
    %324 = vmatpush1.msra.mxu0 %v144
    %325 = vmatprep.subr.mxu0 %v140
    %326 = vmatpush1.msra.mxu0 %v139
    %327 = vmatprep.subr.mxu0 %v135
    %328 = vmatpush1.msra.mxu0 %v134
    %329 = vmatprep.subr.mxu0 %v130
    %330 = vmatpush1.msra.mxu0 %v129
    %331 = vmatprep.subr.mxu0 %v125
    %332 = vmatpush1.msra.mxu0 %v124
    %333 = vmatprep.subr.mxu0 %v120
    %334 = vmatpush1.msra.mxu0 %v119
    %335 = vmatprep.subr.mxu0 %v115
    %336 = vmatpush1.msra.mxu0 %v114
    %337 = vmatprep.subr.mxu0 %v110
    %338 = vmatpush1.msra.mxu0 %v109
    %339 = vmatprep.subr.mxu0 %v105
    %340 = vmatpush1.msra.mxu0 %v104
    %341 = vmatprep.subr.mxu0 %v100
    %342 = vmatpush1.msra.mxu0 %v99
    %343 = vmatprep.subr.mxu0 %v95
    %344 = vmatpush1.msra.mxu0 %v94
    %345 = vmatprep.subr.mxu0 %v90
    %346 = vmatpush1.msra.mxu0 %v89
    %347 = vmatprep.subr.mxu0 0.0
    %348 = vmatpush2.msra.mxu0 0.0
    %349 = vmatprep.subr.mxu0 0.0
    %350 = vmatpush2.msra.mxu0 0.0
    %351 = vmatprep.subr.mxu0 0.0
    %352 = vmatpush2.msra.mxu0 0.0
    %353 = vmatprep.subr.mxu0 0.0
    %354 = vmatpush2.msra.mxu0 0.0
    %355 = vmatprep.subr.mxu0 0.0
    %356 = vmatpush2.msra.mxu0 0.0
    %357 = vmatprep.subr.mxu0 0.0
    %358 = vmatpush2.msra.mxu0 0.0
    %359 = vmatprep.subr.mxu0 0.0
    %360 = vmatpush2.msra.mxu0 0.0
    %361 = vmatprep.subr.mxu0 0.0
    %362 = vmatpush2.msra.mxu0 0.0
    %363 = vmatprep.subr.mxu0 0.0
    %364 = vmatpush2.msra.mxu0 0.0
    %365 = vmatprep.subr.mxu0 0.0
    %366 = vmatpush2.msra.mxu0 0.0
    %367 = vmatprep.subr.mxu0 0.0
    %368 = vmatpush2.msra.mxu0 0.0
    %369 = vmatprep.subr.mxu0 0.0
    %370 = vmatpush2.msra.mxu0 0.0
    %371 = vmatprep.subr.mxu0 0.0
    %372 = vmatpush2.msra.mxu0 0.0
    %373 = vmatprep.subr.mxu0 0.0
    %374 = vmatpush2.msra.mxu0 0.0
    %375 = vmatprep.subr.mxu0 0.0
    %376 = vmatpush2.msra.mxu0 0.0
    %377 = vmatprep.subr.mxu0 0.0
    %378 = vmatpush2.msra.mxu0 0.0
    %379 = vmatprep.mubr.f32.mxu0 0.0
    %380 = vmatmul.mubr.f32.gmra.mxu0 %v311
    %v381 = vpop.f32.mrf.mxu0
    %v382 = vadd.f32 0.0, %v381
    %v383 = vpop.f32.mrf.mxu0
    %v384 = vadd.f32 0.0, %v383
    %385 = vmatprep.mubr.f32.mxu0 0.0
    %386 = vmatmul.mubr.f32.gmra.mxu0 %v312
    %v387 = vpop.f32.mrf.mxu0
    %v388 = vadd.f32 0.0, %v387
    %v389 = vpop.f32.mrf.mxu0
    %v390 = vadd.f32 0.0, %v389
    %391 = vmatprep.mubr.f32.mxu0 0.0
    %392 = vmatmul.mubr.f32.gmra.mxu0 %v313
    %v393 = vpop.f32.mrf.mxu0
    %v394 = vadd.f32 0.0, %v393
    %v395 = vpop.f32.mrf.mxu0
    %v396 = vadd.f32 0.0, %v395
    %397 = vmatprep.mubr.f32.mxu0 0.0
    %398 = vmatmul.mubr.f32.gmra.mxu0 %v314
    %v399 = vpop.f32.mrf.mxu0
    %v400 = vadd.f32 0.0, %v399
    %v401 = vpop.f32.mrf.mxu0
    %v402 = vadd.f32 0.0, %v401
    %403 = vdwg.mxu0
    %404 = vmatprep.subr.mxu0 %v167
    %405 = vmatpush1.msra.mxu0 %v166
    %406 = vmatprep.subr.mxu0 %v162
    %407 = vmatpush1.msra.mxu0 %v161
    %408 = vmatprep.subr.mxu0 %v157
    %409 = vmatpush1.msra.mxu0 %v156
    %410 = vmatprep.subr.mxu0 %v152
    %411 = vmatpush1.msra.mxu0 %v151
    %412 = vmatprep.subr.mxu0 %v147
    %413 = vmatpush1.msra.mxu0 %v146
    %414 = vmatprep.subr.mxu0 %v142
    %415 = vmatpush1.msra.mxu0 %v141
    %416 = vmatprep.subr.mxu0 %v137
    %417 = vmatpush1.msra.mxu0 %v136
    %418 = vmatprep.subr.mxu0 %v132
    %419 = vmatpush1.msra.mxu0 %v131
    %420 = vmatprep.subr.mxu0 %v127
    %421 = vmatpush1.msra.mxu0 %v126
    %422 = vmatprep.subr.mxu0 %v122
    %423 = vmatpush1.msra.mxu0 %v121
    %424 = vmatprep.subr.mxu0 %v117
    %425 = vmatpush1.msra.mxu0 %v116
    %426 = vmatprep.subr.mxu0 %v112
    %427 = vmatpush1.msra.mxu0 %v111
    %428 = vmatprep.subr.mxu0 %v107
    %429 = vmatpush1.msra.mxu0 %v106
    %430 = vmatprep.subr.mxu0 %v102
    %431 = vmatpush1.msra.mxu0 %v101
    %432 = vmatprep.subr.mxu0 %v97
    %433 = vmatpush1.msra.mxu0 %v96
    %434 = vmatprep.subr.mxu0 %v92
    %435 = vmatpush1.msra.mxu0 %v91
    %436 = vmatprep.subr.mxu0 0.0
    %437 = vmatpush2.msra.mxu0 0.0
    %438 = vmatprep.subr.mxu0 0.0
    %439 = vmatpush2.msra.mxu0 0.0
    %440 = vmatprep.subr.mxu0 0.0
    %441 = vmatpush2.msra.mxu0 0.0
    %442 = vmatprep.subr.mxu0 0.0
    %443 = vmatpush2.msra.mxu0 0.0
    %444 = vmatprep.subr.mxu0 0.0
    %445 = vmatpush2.msra.mxu0 0.0
    %446 = vmatprep.subr.mxu0 0.0
    %447 = vmatpush2.msra.mxu0 0.0
    %448 = vmatprep.subr.mxu0 0.0
    %449 = vmatpush2.msra.mxu0 0.0
    %450 = vmatprep.subr.mxu0 0.0
    %451 = vmatpush2.msra.mxu0 0.0
    %452 = vmatprep.subr.mxu0 0.0
    %453 = vmatpush2.msra.mxu0 0.0
    %454 = vmatprep.subr.mxu0 0.0
    %455 = vmatpush2.msra.mxu0 0.0
    %456 = vmatprep.subr.mxu0 0.0
    %457 = vmatpush2.msra.mxu0 0.0
    %458 = vmatprep.subr.mxu0 0.0
    %459 = vmatpush2.msra.mxu0 0.0
    %460 = vmatprep.subr.mxu0 0.0
    %461 = vmatpush2.msra.mxu0 0.0
    %462 = vmatprep.subr.mxu0 0.0
    %463 = vmatpush2.msra.mxu0 0.0
    %464 = vmatprep.subr.mxu0 0.0
    %465 = vmatpush2.msra.mxu0 0.0
    %466 = vmatprep.subr.mxu0 0.0
    %467 = vmatpush2.msra.mxu0 0.0
    %468 = vmatprep.mubr.f32.mxu0 0.0
    %469 = vmatmul.mubr.f32.gmra.mxu0 %v311
    %v470 = vpop.f32.mrf.mxu0
    %v471 = vadd.f32 0.0, %v470
    %v472 = vpop.f32.mrf.mxu0
    %v473 = vadd.f32 0.0, %v472
    %474 = vmatprep.mubr.f32.mxu0 0.0
    %475 = vmatmul.mubr.f32.gmra.mxu0 %v312
    %v476 = vpop.f32.mrf.mxu0
    %v477 = vadd.f32 0.0, %v476
    %v478 = vpop.f32.mrf.mxu0
    %v479 = vadd.f32 0.0, %v478
    %480 = vmatprep.mubr.f32.mxu0 0.0
    %481 = vmatmul.mubr.f32.gmra.mxu0 %v313
    %v482 = vpop.f32.mrf.mxu0
    %v483 = vadd.f32 0.0, %v482
    %v484 = vpop.f32.mrf.mxu0
    %v485 = vadd.f32 0.0, %v484
    %486 = vmatprep.mubr.f32.mxu0 0.0
    %487 = vmatmul.mubr.f32.gmra.mxu0 %v314
    %v488 = vpop.f32.mrf.mxu0
    %v489 = vadd.f32 0.0, %v488
    %v490 = vpop.f32.mrf.mxu0
    %v491 = vadd.f32 0.0, %v490
    %492 = vdwg.mxu0
    %493 = vmatprep.subr.mxu0 0.0
    %494 = vmatpush1.msra.mxu0 %v168
    %495 = vmatprep.subr.mxu0 0.0
    %496 = vmatpush1.msra.mxu0 %v163
    %497 = vmatprep.subr.mxu0 0.0
    %498 = vmatpush1.msra.mxu0 %v158
    %499 = vmatprep.subr.mxu0 0.0
    %500 = vmatpush1.msra.mxu0 %v153
    %501 = vmatprep.subr.mxu0 0.0
    %502 = vmatpush1.msra.mxu0 %v148
    %503 = vmatprep.subr.mxu0 0.0
    %504 = vmatpush1.msra.mxu0 %v143
    %505 = vmatprep.subr.mxu0 0.0
    %506 = vmatpush1.msra.mxu0 %v138
    %507 = vmatprep.subr.mxu0 0.0
    %508 = vmatpush1.msra.mxu0 %v133
    %509 = vmatprep.subr.mxu0 0.0
    %510 = vmatpush1.msra.mxu0 %v128
    %511 = vmatprep.subr.mxu0 0.0
    %512 = vmatpush1.msra.mxu0 %v123
    %513 = vmatprep.subr.mxu0 0.0
    %514 = vmatpush1.msra.mxu0 %v118
    %515 = vmatprep.subr.mxu0 0.0
    %516 = vmatpush1.msra.mxu0 %v113
    %517 = vmatprep.subr.mxu0 0.0
    %518 = vmatpush1.msra.mxu0 %v108
    %519 = vmatprep.subr.mxu0 0.0
    %520 = vmatpush1.msra.mxu0 %v103
    %521 = vmatprep.subr.mxu0 0.0
    %522 = vmatpush1.msra.mxu0 %v98
    %523 = vmatprep.subr.mxu0 0.0
    %524 = vmatpush1.msra.mxu0 %v93
    %525 = vmatprep.subr.mxu0 0.0
    %526 = vmatpush2.msra.mxu0 0.0
    %527 = vmatprep.subr.mxu0 0.0
    %528 = vmatpush2.msra.mxu0 0.0
    %529 = vmatprep.subr.mxu0 0.0
    %530 = vmatpush2.msra.mxu0 0.0
    %531 = vmatprep.subr.mxu0 0.0
    %532 = vmatpush2.msra.mxu0 0.0
    %533 = vmatprep.subr.mxu0 0.0
    %534 = vmatpush2.msra.mxu0 0.0
    %535 = vmatprep.subr.mxu0 0.0
    %536 = vmatpush2.msra.mxu0 0.0
    %537 = vmatprep.subr.mxu0 0.0
    %538 = vmatpush2.msra.mxu0 0.0
    %539 = vmatprep.subr.mxu0 0.0
    %540 = vmatpush2.msra.mxu0 0.0
    %541 = vmatprep.subr.mxu0 0.0
    %542 = vmatpush2.msra.mxu0 0.0
    %543 = vmatprep.subr.mxu0 0.0
    %544 = vmatpush2.msra.mxu0 0.0
    %545 = vmatprep.subr.mxu0 0.0
    %546 = vmatpush2.msra.mxu0 0.0
    %547 = vmatprep.subr.mxu0 0.0
    %548 = vmatpush2.msra.mxu0 0.0
    %549 = vmatprep.subr.mxu0 0.0
    %550 = vmatpush2.msra.mxu0 0.0
    %551 = vmatprep.subr.mxu0 0.0
    %552 = vmatpush2.msra.mxu0 0.0
    %553 = vmatprep.subr.mxu0 0.0
    %554 = vmatpush2.msra.mxu0 0.0
    %555 = vmatprep.subr.mxu0 0.0
    %556 = vmatpush2.msra.mxu0 0.0
    %557 = vmatprep.mubr.f32.mxu0 0.0
    %558 = vmatmul.mubr.f32.gmra.mxu0 %v311
    %v559 = vpop.f32.mrf.mxu0
    %v560 = vadd.f32 0.0, %v559
    %v561 = vpop.f32.mrf.mxu0
    %562 = vmatprep.mubr.f32.mxu0 0.0
    %563 = vmatmul.mubr.f32.gmra.mxu0 %v312
    %v564 = vpop.f32.mrf.mxu0
    %v565 = vadd.f32 0.0, %v564
    %v566 = vpop.f32.mrf.mxu0
    %567 = vmatprep.mubr.f32.mxu0 0.0
    %568 = vmatmul.mubr.f32.gmra.mxu0 %v313
    %v569 = vpop.f32.mrf.mxu0
    %v570 = vadd.f32 0.0, %v569
    %v571 = vpop.f32.mrf.mxu0
    %572 = vmatprep.mubr.f32.mxu0 0.0
    %573 = vmatmul.mubr.f32.gmra.mxu0 %v314
    %v574 = vpop.f32.mrf.mxu0
    %v575 = vadd.f32 0.0, %v574
    %v576 = vpop.f32.mrf.mxu0
    %577 = vdwg.mxu0
    %vm578 = vcmask 64512
    %v580 = vsel %vm578, %v83, 0
    %582 = vmatprep.subr.mxu0 0.0
    %583 = vmatpush1.msra.mxu0 0.0
    %584 = vmatprep.subr.mxu0 0.0
    %585 = vmatpush1.msra.mxu0 0.0
    %586 = vmatprep.subr.mxu0 0.0
    %587 = vmatpush1.msra.mxu0 0.0
    %588 = vmatprep.subr.mxu0 0.0
    %589 = vmatpush1.msra.mxu0 0.0
    %590 = vmatprep.subr.mxu0 0.0
    %591 = vmatpush1.msra.mxu0 0.0
    %592 = vmatprep.subr.mxu0 0.0
    %593 = vmatpush1.msra.mxu0 0.0
    %594 = vmatprep.subr.mxu0 0.0
    %595 = vmatpush1.msra.mxu0 0.0
    %596 = vmatprep.subr.mxu0 0.0
    %597 = vmatpush1.msra.mxu0 0.0
    %598 = vmatprep.subr.mxu0 0.0
    %599 = vmatpush1.msra.mxu0 0.0
    %600 = vmatprep.subr.mxu0 0.0
    %601 = vmatpush1.msra.mxu0 0.0
    %602 = vmatprep.subr.mxu0 0.0
    %603 = vmatpush1.msra.mxu0 0.0
    %604 = vmatprep.subr.mxu0 0.0
    %605 = vmatpush1.msra.mxu0 0.0
    %606 = vmatprep.subr.mxu0 0.0
    %607 = vmatpush1.msra.mxu0 0.0
    %608 = vmatprep.subr.mxu0 0.0
    %609 = vmatpush1.msra.mxu0 0.0
    %610 = vmatprep.subr.mxu0 0.0
    %611 = vmatpush1.msra.mxu0 0.0
    %612 = vmatprep.subr.mxu0 %v384
    %613 = vmatpush1.msra.mxu0 %v382
    %614 = vmatprep.subr.mxu0 0.0
    %615 = vmatpush2.msra.mxu0 0.0
    %616 = vmatprep.subr.mxu0 0.0
    %617 = vmatpush2.msra.mxu0 0.0
    %618 = vmatprep.subr.mxu0 0.0
    %619 = vmatpush2.msra.mxu0 0.0
    %620 = vmatprep.subr.mxu0 0.0
    %621 = vmatpush2.msra.mxu0 0.0
    %622 = vmatprep.subr.mxu0 0.0
    %623 = vmatpush2.msra.mxu0 0.0
    %624 = vmatprep.subr.mxu0 0.0
    %625 = vmatpush2.msra.mxu0 0.0
    %626 = vmatprep.subr.mxu0 0.0
    %627 = vmatpush2.msra.mxu0 0.0
    %628 = vmatprep.subr.mxu0 0.0
    %629 = vmatpush2.msra.mxu0 0.0
    %630 = vmatprep.subr.mxu0 0.0
    %631 = vmatpush2.msra.mxu0 0.0
    %632 = vmatprep.subr.mxu0 0.0
    %633 = vmatpush2.msra.mxu0 0.0
    %634 = vmatprep.subr.mxu0 0.0
    %635 = vmatpush2.msra.mxu0 0.0
    %636 = vmatprep.subr.mxu0 0.0
    %637 = vmatpush2.msra.mxu0 0.0
    %638 = vmatprep.subr.mxu0 0.0
    %639 = vmatpush2.msra.mxu0 0.0
    %640 = vmatprep.subr.mxu0 0.0
    %641 = vmatpush2.msra.mxu0 0.0
    %642 = vmatprep.subr.mxu0 0.0
    %643 = vmatpush2.msra.mxu0 0.0
    %644 = vmatprep.subr.mxu0 0.0
    %645 = vmatpush2.msra.mxu0 0.0
    %646 = vmatprep.mubr.f32.mxu0 0.0
    %647 = vmatmul.mubr.f32.gmra.mxu0 %v580
    %v648 = vpop.f32.mrf.mxu0
    %v649 = vadd.f32 0.0, %v648
    %v650 = vpop.f32.mrf.mxu0
    %v651 = vadd.f32 0.0, %v650
    %652 = vdwg.mxu0
    %653 = vmatprep.subr.mxu0 0.0
    %654 = vmatpush1.msra.mxu0 0.0
    %655 = vmatprep.subr.mxu0 0.0
    %656 = vmatpush1.msra.mxu0 0.0
    %657 = vmatprep.subr.mxu0 0.0
    %658 = vmatpush1.msra.mxu0 0.0
    %659 = vmatprep.subr.mxu0 0.0
    %660 = vmatpush1.msra.mxu0 0.0
    %661 = vmatprep.subr.mxu0 0.0
    %662 = vmatpush1.msra.mxu0 0.0
    %663 = vmatprep.subr.mxu0 0.0
    %664 = vmatpush1.msra.mxu0 0.0
    %665 = vmatprep.subr.mxu0 0.0
    %666 = vmatpush1.msra.mxu0 0.0
    %667 = vmatprep.subr.mxu0 0.0
    %668 = vmatpush1.msra.mxu0 0.0
    %669 = vmatprep.subr.mxu0 0.0
    %670 = vmatpush1.msra.mxu0 0.0
    %671 = vmatprep.subr.mxu0 0.0
    %672 = vmatpush1.msra.mxu0 0.0
    %673 = vmatprep.subr.mxu0 0.0
    %674 = vmatpush1.msra.mxu0 0.0
    %675 = vmatprep.subr.mxu0 0.0
    %676 = vmatpush1.msra.mxu0 0.0
    %677 = vmatprep.subr.mxu0 0.0
    %678 = vmatpush1.msra.mxu0 0.0
    %679 = vmatprep.subr.mxu0 0.0
    %680 = vmatpush1.msra.mxu0 0.0
    %681 = vmatprep.subr.mxu0 0.0
    %682 = vmatpush1.msra.mxu0 0.0
    %683 = vmatprep.subr.mxu0 0.0
    %684 = vmatpush1.msra.mxu0 %v471
    %685 = vmatprep.subr.mxu0 0.0
    %686 = vmatpush2.msra.mxu0 0.0
    %687 = vmatprep.subr.mxu0 0.0
    %688 = vmatpush2.msra.mxu0 0.0
    %689 = vmatprep.subr.mxu0 0.0
    %690 = vmatpush2.msra.mxu0 0.0
    %691 = vmatprep.subr.mxu0 0.0
    %692 = vmatpush2.msra.mxu0 0.0
    %693 = vmatprep.subr.mxu0 0.0
    %694 = vmatpush2.msra.mxu0 0.0
    %695 = vmatprep.subr.mxu0 0.0
    %696 = vmatpush2.msra.mxu0 0.0
    %697 = vmatprep.subr.mxu0 0.0
    %698 = vmatpush2.msra.mxu0 0.0
    %699 = vmatprep.subr.mxu0 0.0
    %700 = vmatpush2.msra.mxu0 0.0
    %701 = vmatprep.subr.mxu0 0.0
    %702 = vmatpush2.msra.mxu0 0.0
    %703 = vmatprep.subr.mxu0 0.0
    %704 = vmatpush2.msra.mxu0 0.0
    %705 = vmatprep.subr.mxu0 0.0
    %706 = vmatpush2.msra.mxu0 0.0
    %707 = vmatprep.subr.mxu0 0.0
    %708 = vmatpush2.msra.mxu0 0.0
    %709 = vmatprep.subr.mxu0 0.0
    %710 = vmatpush2.msra.mxu0 0.0
    %711 = vmatprep.subr.mxu0 0.0
    %712 = vmatpush2.msra.mxu0 0.0
    %713 = vmatprep.subr.mxu0 0.0
    %714 = vmatpush2.msra.mxu0 0.0
    %715 = vmatprep.subr.mxu0 0.0
    %716 = vmatpush2.msra.mxu0 0.0
    %717 = vmatprep.mubr.f32.mxu0 0.0
    %718 = vmatmul.mubr.f32.gmra.mxu0 %v580
    %v719 = vpop.f32.mrf.mxu0
    %v720 = vadd.f32 0.0, %v719
    %v721 = vpop.f32.mrf.mxu0
    %722 = vdwg.mxu0
    %v724 = vsel %vm578, %v84, 0
    %726 = vmatprep.subr.mxu0 0.0
    %727 = vmatpush1.msra.mxu0 0.0
    %728 = vmatprep.subr.mxu0 0.0
    %729 = vmatpush1.msra.mxu0 0.0
    %730 = vmatprep.subr.mxu0 0.0
    %731 = vmatpush1.msra.mxu0 0.0
    %732 = vmatprep.subr.mxu0 0.0
    %733 = vmatpush1.msra.mxu0 0.0
    %734 = vmatprep.subr.mxu0 0.0
    %735 = vmatpush1.msra.mxu0 0.0
    %736 = vmatprep.subr.mxu0 0.0
    %737 = vmatpush1.msra.mxu0 0.0
    %738 = vmatprep.subr.mxu0 0.0
    %739 = vmatpush1.msra.mxu0 0.0
    %740 = vmatprep.subr.mxu0 0.0
    %741 = vmatpush1.msra.mxu0 0.0
    %742 = vmatprep.subr.mxu0 0.0
    %743 = vmatpush1.msra.mxu0 0.0
    %744 = vmatprep.subr.mxu0 0.0
    %745 = vmatpush1.msra.mxu0 0.0
    %746 = vmatprep.subr.mxu0 0.0
    %747 = vmatpush1.msra.mxu0 0.0
    %748 = vmatprep.subr.mxu0 0.0
    %749 = vmatpush1.msra.mxu0 0.0
    %750 = vmatprep.subr.mxu0 0.0
    %751 = vmatpush1.msra.mxu0 0.0
    %752 = vmatprep.subr.mxu0 0.0
    %753 = vmatpush1.msra.mxu0 0.0
    %754 = vmatprep.subr.mxu0 0.0
    %755 = vmatpush1.msra.mxu0 0.0
    %756 = vmatprep.subr.mxu0 %v390
    %757 = vmatpush1.msra.mxu0 %v388
    %758 = vmatprep.subr.mxu0 0.0
    %759 = vmatpush2.msra.mxu0 0.0
    %760 = vmatprep.subr.mxu0 0.0
    %761 = vmatpush2.msra.mxu0 0.0
    %762 = vmatprep.subr.mxu0 0.0
    %763 = vmatpush2.msra.mxu0 0.0
    %764 = vmatprep.subr.mxu0 0.0
    %765 = vmatpush2.msra.mxu0 0.0
    %766 = vmatprep.subr.mxu0 0.0
    %767 = vmatpush2.msra.mxu0 0.0
    %768 = vmatprep.subr.mxu0 0.0
    %769 = vmatpush2.msra.mxu0 0.0
    %770 = vmatprep.subr.mxu0 0.0
    %771 = vmatpush2.msra.mxu0 0.0
    %772 = vmatprep.subr.mxu0 0.0
    %773 = vmatpush2.msra.mxu0 0.0
    %774 = vmatprep.subr.mxu0 0.0
    %775 = vmatpush2.msra.mxu0 0.0
    %776 = vmatprep.subr.mxu0 0.0
    %777 = vmatpush2.msra.mxu0 0.0
    %778 = vmatprep.subr.mxu0 0.0
    %779 = vmatpush2.msra.mxu0 0.0
    %780 = vmatprep.subr.mxu0 0.0
    %781 = vmatpush2.msra.mxu0 0.0
    %782 = vmatprep.subr.mxu0 0.0
    %783 = vmatpush2.msra.mxu0 0.0
    %784 = vmatprep.subr.mxu0 0.0
    %785 = vmatpush2.msra.mxu0 0.0
    %786 = vmatprep.subr.mxu0 0.0
    %787 = vmatpush2.msra.mxu0 0.0
    %788 = vmatprep.subr.mxu0 0.0
    %789 = vmatpush2.msra.mxu0 0.0
    %790 = vmatprep.mubr.f32.mxu0 0.0
    %791 = vmatmul.mubr.f32.gmra.mxu0 %v724
    %v792 = vpop.f32.mrf.mxu0
    %v793 = vadd.f32 0.0, %v792
    %v794 = vpop.f32.mrf.mxu0
    %v795 = vadd.f32 0.0, %v794
    %796 = vdwg.mxu0
    %797 = vmatprep.subr.mxu0 0.0
    %798 = vmatpush1.msra.mxu0 0.0
    %799 = vmatprep.subr.mxu0 0.0
    %800 = vmatpush1.msra.mxu0 0.0
    %801 = vmatprep.subr.mxu0 0.0
    %802 = vmatpush1.msra.mxu0 0.0
    %803 = vmatprep.subr.mxu0 0.0
    %804 = vmatpush1.msra.mxu0 0.0
    %805 = vmatprep.subr.mxu0 0.0
    %806 = vmatpush1.msra.mxu0 0.0
    %807 = vmatprep.subr.mxu0 0.0
    %808 = vmatpush1.msra.mxu0 0.0
    %809 = vmatprep.subr.mxu0 0.0
    %810 = vmatpush1.msra.mxu0 0.0
    %811 = vmatprep.subr.mxu0 0.0
    %812 = vmatpush1.msra.mxu0 0.0
    %813 = vmatprep.subr.mxu0 0.0
    %814 = vmatpush1.msra.mxu0 0.0
    %815 = vmatprep.subr.mxu0 0.0
    %816 = vmatpush1.msra.mxu0 0.0
    %817 = vmatprep.subr.mxu0 0.0
    %818 = vmatpush1.msra.mxu0 0.0
    %819 = vmatprep.subr.mxu0 0.0
    %820 = vmatpush1.msra.mxu0 0.0
    %821 = vmatprep.subr.mxu0 0.0
    %822 = vmatpush1.msra.mxu0 0.0
    %823 = vmatprep.subr.mxu0 0.0
    %824 = vmatpush1.msra.mxu0 0.0
    %825 = vmatprep.subr.mxu0 0.0
    %826 = vmatpush1.msra.mxu0 0.0
    %827 = vmatprep.subr.mxu0 0.0
    %828 = vmatpush1.msra.mxu0 %v477
    %829 = vmatprep.subr.mxu0 0.0
    %830 = vmatpush2.msra.mxu0 0.0
    %831 = vmatprep.subr.mxu0 0.0
    %832 = vmatpush2.msra.mxu0 0.0
    %833 = vmatprep.subr.mxu0 0.0
    %834 = vmatpush2.msra.mxu0 0.0
    %835 = vmatprep.subr.mxu0 0.0
    %836 = vmatpush2.msra.mxu0 0.0
    %837 = vmatprep.subr.mxu0 0.0
    %838 = vmatpush2.msra.mxu0 0.0
    %839 = vmatprep.subr.mxu0 0.0
    %840 = vmatpush2.msra.mxu0 0.0
    %841 = vmatprep.subr.mxu0 0.0
    %842 = vmatpush2.msra.mxu0 0.0
    %843 = vmatprep.subr.mxu0 0.0
    %844 = vmatpush2.msra.mxu0 0.0
    %845 = vmatprep.subr.mxu0 0.0
    %846 = vmatpush2.msra.mxu0 0.0
    %847 = vmatprep.subr.mxu0 0.0
    %848 = vmatpush2.msra.mxu0 0.0
    %849 = vmatprep.subr.mxu0 0.0
    %850 = vmatpush2.msra.mxu0 0.0
    %851 = vmatprep.subr.mxu0 0.0
    %852 = vmatpush2.msra.mxu0 0.0
    %853 = vmatprep.subr.mxu0 0.0
    %854 = vmatpush2.msra.mxu0 0.0
    %855 = vmatprep.subr.mxu0 0.0
    %856 = vmatpush2.msra.mxu0 0.0
    %857 = vmatprep.subr.mxu0 0.0
    %858 = vmatpush2.msra.mxu0 0.0
    %859 = vmatprep.subr.mxu0 0.0
    %860 = vmatpush2.msra.mxu0 0.0
    %861 = vmatprep.mubr.f32.mxu0 0.0
    %862 = vmatmul.mubr.f32.gmra.mxu0 %v724
    %v863 = vpop.f32.mrf.mxu0
    %v864 = vadd.f32 0.0, %v863
    %v865 = vpop.f32.mrf.mxu0
    %866 = vdwg.mxu0
    %v868 = vsel %vm578, %v85, 0
    %870 = vmatprep.subr.mxu0 0.0
    %871 = vmatpush1.msra.mxu0 0.0
    %872 = vmatprep.subr.mxu0 0.0
    %873 = vmatpush1.msra.mxu0 0.0
    %874 = vmatprep.subr.mxu0 0.0
    %875 = vmatpush1.msra.mxu0 0.0
    %876 = vmatprep.subr.mxu0 0.0
    %877 = vmatpush1.msra.mxu0 0.0
    %878 = vmatprep.subr.mxu0 0.0
    %879 = vmatpush1.msra.mxu0 0.0
    %880 = vmatprep.subr.mxu0 0.0
    %881 = vmatpush1.msra.mxu0 0.0
    %882 = vmatprep.subr.mxu0 0.0
    %883 = vmatpush1.msra.mxu0 0.0
    %884 = vmatprep.subr.mxu0 0.0
    %885 = vmatpush1.msra.mxu0 0.0
    %886 = vmatprep.subr.mxu0 0.0
    %887 = vmatpush1.msra.mxu0 0.0
    %888 = vmatprep.subr.mxu0 0.0
    %889 = vmatpush1.msra.mxu0 0.0
    %890 = vmatprep.subr.mxu0 0.0
    %891 = vmatpush1.msra.mxu0 0.0
    %892 = vmatprep.subr.mxu0 0.0
    %893 = vmatpush1.msra.mxu0 0.0
    %894 = vmatprep.subr.mxu0 0.0
    %895 = vmatpush1.msra.mxu0 0.0
    %896 = vmatprep.subr.mxu0 0.0
    %897 = vmatpush1.msra.mxu0 0.0
    %898 = vmatprep.subr.mxu0 0.0
    %899 = vmatpush1.msra.mxu0 0.0
    %900 = vmatprep.subr.mxu0 %v396
    %901 = vmatpush1.msra.mxu0 %v394
    %902 = vmatprep.subr.mxu0 0.0
    %903 = vmatpush2.msra.mxu0 0.0
    %904 = vmatprep.subr.mxu0 0.0
    %905 = vmatpush2.msra.mxu0 0.0
    %906 = vmatprep.subr.mxu0 0.0
    %907 = vmatpush2.msra.mxu0 0.0
    %908 = vmatprep.subr.mxu0 0.0
    %909 = vmatpush2.msra.mxu0 0.0
    %910 = vmatprep.subr.mxu0 0.0
    %911 = vmatpush2.msra.mxu0 0.0
    %912 = vmatprep.subr.mxu0 0.0
    %913 = vmatpush2.msra.mxu0 0.0
    %914 = vmatprep.subr.mxu0 0.0
    %915 = vmatpush2.msra.mxu0 0.0
    %916 = vmatprep.subr.mxu0 0.0
    %917 = vmatpush2.msra.mxu0 0.0
    %918 = vmatprep.subr.mxu0 0.0
    %919 = vmatpush2.msra.mxu0 0.0
    %920 = vmatprep.subr.mxu0 0.0
    %921 = vmatpush2.msra.mxu0 0.0
    %922 = vmatprep.subr.mxu0 0.0
    %923 = vmatpush2.msra.mxu0 0.0
    %924 = vmatprep.subr.mxu0 0.0
    %925 = vmatpush2.msra.mxu0 0.0
    %926 = vmatprep.subr.mxu0 0.0
    %927 = vmatpush2.msra.mxu0 0.0
    %928 = vmatprep.subr.mxu0 0.0
    %929 = vmatpush2.msra.mxu0 0.0
    %930 = vmatprep.subr.mxu0 0.0
    %931 = vmatpush2.msra.mxu0 0.0
    %932 = vmatprep.subr.mxu0 0.0
    %933 = vmatpush2.msra.mxu0 0.0
    %934 = vmatprep.mubr.f32.mxu0 0.0
    %935 = vmatmul.mubr.f32.gmra.mxu0 %v868
    %v936 = vpop.f32.mrf.mxu0
    %v937 = vadd.f32 0.0, %v936
    %v938 = vpop.f32.mrf.mxu0
    %v939 = vadd.f32 0.0, %v938
    %940 = vdwg.mxu0
    %941 = vmatprep.subr.mxu0 0.0
    %942 = vmatpush1.msra.mxu0 0.0
    %943 = vmatprep.subr.mxu0 0.0
    %944 = vmatpush1.msra.mxu0 0.0
    %945 = vmatprep.subr.mxu0 0.0
    %946 = vmatpush1.msra.mxu0 0.0
    %947 = vmatprep.subr.mxu0 0.0
    %948 = vmatpush1.msra.mxu0 0.0
    %949 = vmatprep.subr.mxu0 0.0
    %950 = vmatpush1.msra.mxu0 0.0
    %951 = vmatprep.subr.mxu0 0.0
    %952 = vmatpush1.msra.mxu0 0.0
    %953 = vmatprep.subr.mxu0 0.0
    %954 = vmatpush1.msra.mxu0 0.0
    %955 = vmatprep.subr.mxu0 0.0
    %956 = vmatpush1.msra.mxu0 0.0
    %957 = vmatprep.subr.mxu0 0.0
    %958 = vmatpush1.msra.mxu0 0.0
    %959 = vmatprep.subr.mxu0 0.0
    %960 = vmatpush1.msra.mxu0 0.0
    %961 = vmatprep.subr.mxu0 0.0
    %962 = vmatpush1.msra.mxu0 0.0
    %963 = vmatprep.subr.mxu0 0.0
    %964 = vmatpush1.msra.mxu0 0.0
    %965 = vmatprep.subr.mxu0 0.0
    %966 = vmatpush1.msra.mxu0 0.0
    %967 = vmatprep.subr.mxu0 0.0
    %968 = vmatpush1.msra.mxu0 0.0
    %969 = vmatprep.subr.mxu0 0.0
    %970 = vmatpush1.msra.mxu0 0.0
    %971 = vmatprep.subr.mxu0 0.0
    %972 = vmatpush1.msra.mxu0 %v483
    %973 = vmatprep.subr.mxu0 0.0
    %974 = vmatpush2.msra.mxu0 0.0
    %975 = vmatprep.subr.mxu0 0.0
    %976 = vmatpush2.msra.mxu0 0.0
    %977 = vmatprep.subr.mxu0 0.0
    %978 = vmatpush2.msra.mxu0 0.0
    %979 = vmatprep.subr.mxu0 0.0
    %980 = vmatpush2.msra.mxu0 0.0
    %981 = vmatprep.subr.mxu0 0.0
    %982 = vmatpush2.msra.mxu0 0.0
    %983 = vmatprep.subr.mxu0 0.0
    %984 = vmatpush2.msra.mxu0 0.0
    %985 = vmatprep.subr.mxu0 0.0
    %986 = vmatpush2.msra.mxu0 0.0
    %987 = vmatprep.subr.mxu0 0.0
    %988 = vmatpush2.msra.mxu0 0.0
    %989 = vmatprep.subr.mxu0 0.0
    %990 = vmatpush2.msra.mxu0 0.0
    %991 = vmatprep.subr.mxu0 0.0
    %992 = vmatpush2.msra.mxu0 0.0
    %993 = vmatprep.subr.mxu0 0.0
    %994 = vmatpush2.msra.mxu0 0.0
    %995 = vmatprep.subr.mxu0 0.0
    %996 = vmatpush2.msra.mxu0 0.0
    %997 = vmatprep.subr.mxu0 0.0
    %998 = vmatpush2.msra.mxu0 0.0
    %999 = vmatprep.subr.mxu0 0.0
    %1000 = vmatpush2.msra.mxu0 0.0
    %1001 = vmatprep.subr.mxu0 0.0
    %1002 = vmatpush2.msra.mxu0 0.0
    %1003 = vmatprep.subr.mxu0 0.0
    %1004 = vmatpush2.msra.mxu0 0.0
    %1005 = vmatprep.mubr.f32.mxu0 0.0
    %1006 = vmatmul.mubr.f32.gmra.mxu0 %v868
    %v1007 = vpop.f32.mrf.mxu0
    %v1008 = vadd.f32 0.0, %v1007
    %v1009 = vpop.f32.mrf.mxu0
    %1010 = vdwg.mxu0
    %v1012 = vsel %vm578, %v86, 0
    %1014 = vmatprep.subr.mxu0 0.0
    %1015 = vmatpush1.msra.mxu0 0.0
    %1016 = vmatprep.subr.mxu0 0.0
    %1017 = vmatpush1.msra.mxu0 0.0
    %1018 = vmatprep.subr.mxu0 0.0
    %1019 = vmatpush1.msra.mxu0 0.0
    %1020 = vmatprep.subr.mxu0 0.0
    %1021 = vmatpush1.msra.mxu0 0.0
    %1022 = vmatprep.subr.mxu0 0.0
    %1023 = vmatpush1.msra.mxu0 0.0
    %1024 = vmatprep.subr.mxu0 0.0
    %1025 = vmatpush1.msra.mxu0 0.0
    %1026 = vmatprep.subr.mxu0 0.0
    %1027 = vmatpush1.msra.mxu0 0.0
    %1028 = vmatprep.subr.mxu0 0.0
    %1029 = vmatpush1.msra.mxu0 0.0
    %1030 = vmatprep.subr.mxu0 0.0
    %1031 = vmatpush1.msra.mxu0 0.0
    %1032 = vmatprep.subr.mxu0 0.0
    %1033 = vmatpush1.msra.mxu0 0.0
    %1034 = vmatprep.subr.mxu0 0.0
    %1035 = vmatpush1.msra.mxu0 0.0
    %1036 = vmatprep.subr.mxu0 0.0
    %1037 = vmatpush1.msra.mxu0 0.0
    %1038 = vmatprep.subr.mxu0 0.0
    %1039 = vmatpush1.msra.mxu0 0.0
    %1040 = vmatprep.subr.mxu0 0.0
    %1041 = vmatpush1.msra.mxu0 0.0
    %1042 = vmatprep.subr.mxu0 0.0
    %1043 = vmatpush1.msra.mxu0 0.0
    %1044 = vmatprep.subr.mxu0 %v402
    %1045 = vmatpush1.msra.mxu0 %v400
    %1046 = vmatprep.subr.mxu0 0.0
    %1047 = vmatpush2.msra.mxu0 0.0
    %1048 = vmatprep.subr.mxu0 0.0
    %1049 = vmatpush2.msra.mxu0 0.0
    %1050 = vmatprep.subr.mxu0 0.0
    %1051 = vmatpush2.msra.mxu0 0.0
    %1052 = vmatprep.subr.mxu0 0.0
    %1053 = vmatpush2.msra.mxu0 0.0
    %1054 = vmatprep.subr.mxu0 0.0
    %1055 = vmatpush2.msra.mxu0 0.0
    %1056 = vmatprep.subr.mxu0 0.0
    %1057 = vmatpush2.msra.mxu0 0.0
    %1058 = vmatprep.subr.mxu0 0.0
    %1059 = vmatpush2.msra.mxu0 0.0
    %1060 = vmatprep.subr.mxu0 0.0
    %1061 = vmatpush2.msra.mxu0 0.0
    %1062 = vmatprep.subr.mxu0 0.0
    %1063 = vmatpush2.msra.mxu0 0.0
    %1064 = vmatprep.subr.mxu0 0.0
    %1065 = vmatpush2.msra.mxu0 0.0
    %1066 = vmatprep.subr.mxu0 0.0
    %1067 = vmatpush2.msra.mxu0 0.0
    %1068 = vmatprep.subr.mxu0 0.0
    %1069 = vmatpush2.msra.mxu0 0.0
    %1070 = vmatprep.subr.mxu0 0.0
    %1071 = vmatpush2.msra.mxu0 0.0
    %1072 = vmatprep.subr.mxu0 0.0
    %1073 = vmatpush2.msra.mxu0 0.0
    %1074 = vmatprep.subr.mxu0 0.0
    %1075 = vmatpush2.msra.mxu0 0.0
    %1076 = vmatprep.subr.mxu0 0.0
    %1077 = vmatpush2.msra.mxu0 0.0
    %1078 = vmatprep.mubr.f32.mxu0 0.0
    %1079 = vmatmul.mubr.f32.gmra.mxu0 %v1012
    %v1080 = vpop.f32.mrf.mxu0
    %v1081 = vadd.f32 0.0, %v1080
    %v1082 = vpop.f32.mrf.mxu0
    %v1083 = vadd.f32 0.0, %v1082
    %1084 = vdwg.mxu0
    %1085 = vmatprep.subr.mxu0 0.0
    %1086 = vmatpush1.msra.mxu0 0.0
    %1087 = vmatprep.subr.mxu0 0.0
    %1088 = vmatpush1.msra.mxu0 0.0
    %1089 = vmatprep.subr.mxu0 0.0
    %1090 = vmatpush1.msra.mxu0 0.0
    %1091 = vmatprep.subr.mxu0 0.0
    %1092 = vmatpush1.msra.mxu0 0.0
    %1093 = vmatprep.subr.mxu0 0.0
    %1094 = vmatpush1.msra.mxu0 0.0
    %1095 = vmatprep.subr.mxu0 0.0
    %1096 = vmatpush1.msra.mxu0 0.0
    %1097 = vmatprep.subr.mxu0 0.0
    %1098 = vmatpush1.msra.mxu0 0.0
    %1099 = vmatprep.subr.mxu0 0.0
    %1100 = vmatpush1.msra.mxu0 0.0
    %1101 = vmatprep.subr.mxu0 0.0
    %1102 = vmatpush1.msra.mxu0 0.0
    %1103 = vmatprep.subr.mxu0 0.0
    %1104 = vmatpush1.msra.mxu0 0.0
    %1105 = vmatprep.subr.mxu0 0.0
    %1106 = vmatpush1.msra.mxu0 0.0
    %1107 = vmatprep.subr.mxu0 0.0
    %1108 = vmatpush1.msra.mxu0 0.0
    %1109 = vmatprep.subr.mxu0 0.0
    %1110 = vmatpush1.msra.mxu0 0.0
    %1111 = vmatprep.subr.mxu0 0.0
    %1112 = vmatpush1.msra.mxu0 0.0
    %1113 = vmatprep.subr.mxu0 0.0
    %1114 = vmatpush1.msra.mxu0 0.0
    %1115 = vmatprep.subr.mxu0 0.0
    %1116 = vmatpush1.msra.mxu0 %v489
    %1117 = vmatprep.subr.mxu0 0.0
    %1118 = vmatpush2.msra.mxu0 0.0
    %1119 = vmatprep.subr.mxu0 0.0
    %1120 = vmatpush2.msra.mxu0 0.0
    %1121 = vmatprep.subr.mxu0 0.0
    %1122 = vmatpush2.msra.mxu0 0.0
    %1123 = vmatprep.subr.mxu0 0.0
    %1124 = vmatpush2.msra.mxu0 0.0
    %1125 = vmatprep.subr.mxu0 0.0
    %1126 = vmatpush2.msra.mxu0 0.0
    %1127 = vmatprep.subr.mxu0 0.0
    %1128 = vmatpush2.msra.mxu0 0.0
    %1129 = vmatprep.subr.mxu0 0.0
    %1130 = vmatpush2.msra.mxu0 0.0
    %1131 = vmatprep.subr.mxu0 0.0
    %1132 = vmatpush2.msra.mxu0 0.0
    %1133 = vmatprep.subr.mxu0 0.0
    %1134 = vmatpush2.msra.mxu0 0.0
    %1135 = vmatprep.subr.mxu0 0.0
    %1136 = vmatpush2.msra.mxu0 0.0
    %1137 = vmatprep.subr.mxu0 0.0
    %1138 = vmatpush2.msra.mxu0 0.0
    %1139 = vmatprep.subr.mxu0 0.0
    %1140 = vmatpush2.msra.mxu0 0.0
    %1141 = vmatprep.subr.mxu0 0.0
    %1142 = vmatpush2.msra.mxu0 0.0
    %1143 = vmatprep.subr.mxu0 0.0
    %1144 = vmatpush2.msra.mxu0 0.0
    %1145 = vmatprep.subr.mxu0 0.0
    %1146 = vmatpush2.msra.mxu0 0.0
    %1147 = vmatprep.subr.mxu0 0.0
    %1148 = vmatpush2.msra.mxu0 0.0
    %1149 = vmatprep.mubr.f32.mxu0 0.0
    %1150 = vmatmul.mubr.f32.gmra.mxu0 %v1012
    %v1151 = vpop.f32.mrf.mxu0
    %v1152 = vadd.f32 0.0, %v1151
    %v1153 = vpop.f32.mrf.mxu0
    %1154 = vdwg.mxu0
    %v1155 = vadd.f32 %v649, %v473
    %v1156 = vadd.f32 %v651, %v560
    %v1157 = vadd.f32 %v793, %v479
    %v1158 = vadd.f32 %v795, %v565
    %v1159 = vadd.f32 %v937, %v485
    %v1160 = vadd.f32 %v939, %v570
    %v1161 = vadd.f32 %v1081, %v491
    %v1162 = vadd.f32 %v1083, %v575
    %v1163 = vxor.u32 %v1155, 2147483648
    %v1164 = vxor.u32 %v1156, 2147483648
    %v1165 = vxor.u32 %v1157, 2147483648
    %v1166 = vxor.u32 %v1158, 2147483648
    %v1167 = vxor.u32 %v1159, 2147483648
    %v1168 = vxor.u32 %v1160, 2147483648
    %v1169 = vxor.u32 %v1161, 2147483648
    %v1170 = vxor.u32 %v1162, 2147483648
    %v1171 = vmul.f32 %v1163, 1.442695
    %v1172 = vpow.pop %v1171
    %v1173 = vmul.f32 %v1164, 1.442695
    %v1174 = vpow.pop %v1173
    %v1175 = vmul.f32 %v1165, 1.442695
    %v1176 = vpow.pop %v1175
    %v1177 = vmul.f32 %v1166, 1.442695
    %v1178 = vpow.pop %v1177
    %v1179 = vmul.f32 %v1167, 1.442695
    %v1180 = vpow.pop %v1179
    %v1181 = vmul.f32 %v1168, 1.442695
    %v1182 = vpow.pop %v1181
    %v1183 = vmul.f32 %v1169, 1.442695
    %v1184 = vpow.pop %v1183
    %v1185 = vmul.f32 %v1170, 1.442695
    %v1186 = vpow.pop %v1185
    %v1187 = vadd.f32 %v1172, 1.0
    %v1188 = vadd.f32 %v1174, 1.0
    %v1189 = vadd.f32 %v1176, 1.0
    %v1190 = vadd.f32 %v1178, 1.0
    %v1191 = vadd.f32 %v1180, 1.0
    %v1192 = vadd.f32 %v1182, 1.0
    %v1193 = vadd.f32 %v1184, 1.0
    %v1194 = vadd.f32 %v1186, 1.0
    %v1195 = vrcp.pop %v1187
    %v1196 = vmul.f32 1.0, %v1195
    %v1197 = vrcp.pop %v1188
    %v1198 = vmul.f32 1.0, %v1197
    %v1199 = vrcp.pop %v1189
    %v1200 = vmul.f32 1.0, %v1199
    %v1201 = vrcp.pop %v1190
    %v1202 = vmul.f32 1.0, %v1201
    %v1203 = vrcp.pop %v1191
    %v1204 = vmul.f32 1.0, %v1203
    %v1205 = vrcp.pop %v1192
    %v1206 = vmul.f32 1.0, %v1205
    %v1207 = vrcp.pop %v1193
    %v1208 = vmul.f32 1.0, %v1207
    %v1209 = vrcp.pop %v1194
    %v1210 = vmul.f32 1.0, %v1209
    %v1211 = vmul.f32 %v311, %v1198
    %v1212 = vmul.f32 %v312, %v1202
    %v1213 = vmul.f32 %v313, %v1206
    %v1214 = vmul.f32 %v314, %v1210
    %1215 = vmatprep.subr.mxu0 0.0
    %1216 = vmatpush1.msra.mxu0 %v184
    %1217 = vmatprep.subr.mxu0 0.0
    %1218 = vmatpush1.msra.mxu0 %v183
    %1219 = vmatprep.subr.mxu0 0.0
    %1220 = vmatpush1.msra.mxu0 %v182
    %1221 = vmatprep.subr.mxu0 0.0
    %1222 = vmatpush1.msra.mxu0 %v181
    %1223 = vmatprep.subr.mxu0 0.0
    %1224 = vmatpush1.msra.mxu0 %v180
    %1225 = vmatprep.subr.mxu0 0.0
    %1226 = vmatpush1.msra.mxu0 %v179
    %1227 = vmatprep.subr.mxu0 0.0
    %1228 = vmatpush1.msra.mxu0 %v178
    %1229 = vmatprep.subr.mxu0 0.0
    %1230 = vmatpush1.msra.mxu0 %v177
    %1231 = vmatprep.subr.mxu0 0.0
    %1232 = vmatpush1.msra.mxu0 %v176
    %1233 = vmatprep.subr.mxu0 0.0
    %1234 = vmatpush1.msra.mxu0 %v175
    %1235 = vmatprep.subr.mxu0 0.0
    %1236 = vmatpush1.msra.mxu0 %v174
    %1237 = vmatprep.subr.mxu0 0.0
    %1238 = vmatpush1.msra.mxu0 %v173
    %1239 = vmatprep.subr.mxu0 0.0
    %1240 = vmatpush1.msra.mxu0 %v172
    %1241 = vmatprep.subr.mxu0 0.0
    %1242 = vmatpush1.msra.mxu0 %v171
    %1243 = vmatprep.subr.mxu0 0.0
    %1244 = vmatpush1.msra.mxu0 %v170
    %1245 = vmatprep.subr.mxu0 0.0
    %1246 = vmatpush1.msra.mxu0 %v169
    %1247 = vmatprep.subr.mxu0 0.0
    %1248 = vmatpush2.msra.mxu0 0.0
    %1249 = vmatprep.subr.mxu0 0.0
    %1250 = vmatpush2.msra.mxu0 0.0
    %1251 = vmatprep.subr.mxu0 0.0
    %1252 = vmatpush2.msra.mxu0 0.0
    %1253 = vmatprep.subr.mxu0 0.0
    %1254 = vmatpush2.msra.mxu0 0.0
    %1255 = vmatprep.subr.mxu0 0.0
    %1256 = vmatpush2.msra.mxu0 0.0
    %1257 = vmatprep.subr.mxu0 0.0
    %1258 = vmatpush2.msra.mxu0 0.0
    %1259 = vmatprep.subr.mxu0 0.0
    %1260 = vmatpush2.msra.mxu0 0.0
    %1261 = vmatprep.subr.mxu0 0.0
    %1262 = vmatpush2.msra.mxu0 0.0
    %1263 = vmatprep.subr.mxu0 0.0
    %1264 = vmatpush2.msra.mxu0 0.0
    %1265 = vmatprep.subr.mxu0 0.0
    %1266 = vmatpush2.msra.mxu0 0.0
    %1267 = vmatprep.subr.mxu0 0.0
    %1268 = vmatpush2.msra.mxu0 0.0
    %1269 = vmatprep.subr.mxu0 0.0
    %1270 = vmatpush2.msra.mxu0 0.0
    %1271 = vmatprep.subr.mxu0 0.0
    %1272 = vmatpush2.msra.mxu0 0.0
    %1273 = vmatprep.subr.mxu0 0.0
    %1274 = vmatpush2.msra.mxu0 0.0
    %1275 = vmatprep.subr.mxu0 0.0
    %1276 = vmatpush2.msra.mxu0 0.0
    %1277 = vmatprep.subr.mxu0 0.0
    %1278 = vmatpush2.msra.mxu0 0.0
    %1279 = vmatprep.mubr.f32.mxu0 0.0
    %1280 = vmatmul.mubr.f32.gmra.mxu0 %v1211
    %v1281 = vpop.f32.mrf.mxu0
    %v1282 = vadd.f32 0.0, %v1281
    %v1283 = vpop.f32.mrf.mxu0
    %1284 = vmatprep.mubr.f32.mxu0 0.0
    %1285 = vmatmul.mubr.f32.gmra.mxu0 %v1212
    %v1286 = vpop.f32.mrf.mxu0
    %v1287 = vadd.f32 0.0, %v1286
    %v1288 = vpop.f32.mrf.mxu0
    %1289 = vmatprep.mubr.f32.mxu0 0.0
    %1290 = vmatmul.mubr.f32.gmra.mxu0 %v1213
    %v1291 = vpop.f32.mrf.mxu0
    %v1292 = vadd.f32 0.0, %v1291
    %v1293 = vpop.f32.mrf.mxu0
    %1294 = vmatprep.mubr.f32.mxu0 0.0
    %1295 = vmatmul.mubr.f32.gmra.mxu0 %v1214
    %v1296 = vpop.f32.mrf.mxu0
    %v1297 = vadd.f32 0.0, %v1296
    %v1298 = vpop.f32.mrf.mxu0
    %1299 = vdwg.mxu0
    %v1300 = vadd.f32 %v720, %v1282
    %v1301 = vadd.f32 %v864, %v1287
    %v1302 = vadd.f32 %v1008, %v1292
    %v1303 = vadd.f32 %v1152, %v1297
    %v1304 = vmul.f32 %v192, %v1300
    %v1305 = vmul.f32 %v197, %v1301
    %v1306 = vmul.f32 %v202, %v1302
    %v1307 = vmul.f32 %v207, %v1303
    %v1308 = vmax.f32 %v1304, 0.0
    %v1309 = vmax.f32 %v1305, 0.0
    %v1310 = vmax.f32 %v1306, 0.0
    %v1311 = vmax.f32 %v1307, 0.0
    %v1312 = vsub.f32 %v1308, %v311
    %v1313 = vsub.f32 %v1309, %v312
    %v1314 = vsub.f32 %v1310, %v313
    %v1315 = vsub.f32 %v1311, %v314
    %v1316 = vmul.f32 %v1196, %v1312
    %v1317 = vmul.f32 %v1200, %v1313
    %v1318 = vmul.f32 %v1204, %v1314
    %v1319 = vmul.f32 %v1208, %v1315
    %v1320 = vadd.f32 %v311, %v1316
    %v1321 = vadd.f32 %v312, %v1317
    %v1322 = vadd.f32 %v313, %v1318
    %v1323 = vadd.f32 %v314, %v1319
    %1324 = vmatprep.subr.mxu0 %v165
    %1325 = vmatpush1.msra.mxu0 %v164
    %1326 = vmatprep.subr.mxu0 %v160
    %1327 = vmatpush1.msra.mxu0 %v159
    %1328 = vmatprep.subr.mxu0 %v155
    %1329 = vmatpush1.msra.mxu0 %v154
    %1330 = vmatprep.subr.mxu0 %v150
    %1331 = vmatpush1.msra.mxu0 %v149
    %1332 = vmatprep.subr.mxu0 %v145
    %1333 = vmatpush1.msra.mxu0 %v144
    %1334 = vmatprep.subr.mxu0 %v140
    %1335 = vmatpush1.msra.mxu0 %v139
    %1336 = vmatprep.subr.mxu0 %v135
    %1337 = vmatpush1.msra.mxu0 %v134
    %1338 = vmatprep.subr.mxu0 %v130
    %1339 = vmatpush1.msra.mxu0 %v129
    %1340 = vmatprep.subr.mxu0 %v125
    %1341 = vmatpush1.msra.mxu0 %v124
    %1342 = vmatprep.subr.mxu0 %v120
    %1343 = vmatpush1.msra.mxu0 %v119
    %1344 = vmatprep.subr.mxu0 %v115
    %1345 = vmatpush1.msra.mxu0 %v114
    %1346 = vmatprep.subr.mxu0 %v110
    %1347 = vmatpush1.msra.mxu0 %v109
    %1348 = vmatprep.subr.mxu0 %v105
    %1349 = vmatpush1.msra.mxu0 %v104
    %1350 = vmatprep.subr.mxu0 %v100
    %1351 = vmatpush1.msra.mxu0 %v99
    %1352 = vmatprep.subr.mxu0 %v95
    %1353 = vmatpush1.msra.mxu0 %v94
    %1354 = vmatprep.subr.mxu0 %v90
    %1355 = vmatpush1.msra.mxu0 %v89
    %1356 = vmatprep.subr.mxu0 0.0
    %1357 = vmatpush2.msra.mxu0 0.0
    %1358 = vmatprep.subr.mxu0 0.0
    %1359 = vmatpush2.msra.mxu0 0.0
    %1360 = vmatprep.subr.mxu0 0.0
    %1361 = vmatpush2.msra.mxu0 0.0
    %1362 = vmatprep.subr.mxu0 0.0
    %1363 = vmatpush2.msra.mxu0 0.0
    %1364 = vmatprep.subr.mxu0 0.0
    %1365 = vmatpush2.msra.mxu0 0.0
    %1366 = vmatprep.subr.mxu0 0.0
    %1367 = vmatpush2.msra.mxu0 0.0
    %1368 = vmatprep.subr.mxu0 0.0
    %1369 = vmatpush2.msra.mxu0 0.0
    %1370 = vmatprep.subr.mxu0 0.0
    %1371 = vmatpush2.msra.mxu0 0.0
    %1372 = vmatprep.subr.mxu0 0.0
    %1373 = vmatpush2.msra.mxu0 0.0
    %1374 = vmatprep.subr.mxu0 0.0
    %1375 = vmatpush2.msra.mxu0 0.0
    %1376 = vmatprep.subr.mxu0 0.0
    %1377 = vmatpush2.msra.mxu0 0.0
    %1378 = vmatprep.subr.mxu0 0.0
    %1379 = vmatpush2.msra.mxu0 0.0
    %1380 = vmatprep.subr.mxu0 0.0
    %1381 = vmatpush2.msra.mxu0 0.0
    %1382 = vmatprep.subr.mxu0 0.0
    %1383 = vmatpush2.msra.mxu0 0.0
    %1384 = vmatprep.subr.mxu0 0.0
    %1385 = vmatpush2.msra.mxu0 0.0
    %1386 = vmatprep.subr.mxu0 0.0
    %1387 = vmatpush2.msra.mxu0 0.0
    %1388 = vmatprep.mubr.f32.mxu0 0.0
    %1389 = vmatmul.mubr.f32.gmra.mxu0 %v1320
    %v1390 = vpop.f32.mrf.mxu0
    %v1391 = vadd.f32 0.0, %v1390
    %v1392 = vpop.f32.mrf.mxu0
    %v1393 = vadd.f32 0.0, %v1392
    %1394 = vmatprep.mubr.f32.mxu0 0.0
    %1395 = vmatmul.mubr.f32.gmra.mxu0 %v1321
    %v1396 = vpop.f32.mrf.mxu0
    %v1397 = vadd.f32 0.0, %v1396
    %v1398 = vpop.f32.mrf.mxu0
    %v1399 = vadd.f32 0.0, %v1398
    %1400 = vmatprep.mubr.f32.mxu0 0.0
    %1401 = vmatmul.mubr.f32.gmra.mxu0 %v1322
    %v1402 = vpop.f32.mrf.mxu0
    %v1403 = vadd.f32 0.0, %v1402
    %v1404 = vpop.f32.mrf.mxu0
    %v1405 = vadd.f32 0.0, %v1404
    %1406 = vmatprep.mubr.f32.mxu0 0.0
    %1407 = vmatmul.mubr.f32.gmra.mxu0 %v1323
    %v1408 = vpop.f32.mrf.mxu0
    %v1409 = vadd.f32 0.0, %v1408
    %v1410 = vpop.f32.mrf.mxu0
    %v1411 = vadd.f32 0.0, %v1410
    %1412 = vdwg.mxu0
    %1413 = vmatprep.subr.mxu0 %v167
    %1414 = vmatpush1.msra.mxu0 %v166
    %1415 = vmatprep.subr.mxu0 %v162
    %1416 = vmatpush1.msra.mxu0 %v161
    %1417 = vmatprep.subr.mxu0 %v157
    %1418 = vmatpush1.msra.mxu0 %v156
    %1419 = vmatprep.subr.mxu0 %v152
    %1420 = vmatpush1.msra.mxu0 %v151
    %1421 = vmatprep.subr.mxu0 %v147
    %1422 = vmatpush1.msra.mxu0 %v146
    %1423 = vmatprep.subr.mxu0 %v142
    %1424 = vmatpush1.msra.mxu0 %v141
    %1425 = vmatprep.subr.mxu0 %v137
    %1426 = vmatpush1.msra.mxu0 %v136
    %1427 = vmatprep.subr.mxu0 %v132
    %1428 = vmatpush1.msra.mxu0 %v131
    %1429 = vmatprep.subr.mxu0 %v127
    %1430 = vmatpush1.msra.mxu0 %v126
    %1431 = vmatprep.subr.mxu0 %v122
    %1432 = vmatpush1.msra.mxu0 %v121
    %1433 = vmatprep.subr.mxu0 %v117
    %1434 = vmatpush1.msra.mxu0 %v116
    %1435 = vmatprep.subr.mxu0 %v112
    %1436 = vmatpush1.msra.mxu0 %v111
    %1437 = vmatprep.subr.mxu0 %v107
    %1438 = vmatpush1.msra.mxu0 %v106
    %1439 = vmatprep.subr.mxu0 %v102
    %1440 = vmatpush1.msra.mxu0 %v101
    %1441 = vmatprep.subr.mxu0 %v97
    %1442 = vmatpush1.msra.mxu0 %v96
    %1443 = vmatprep.subr.mxu0 %v92
    %1444 = vmatpush1.msra.mxu0 %v91
    %1445 = vmatprep.subr.mxu0 0.0
    %1446 = vmatpush2.msra.mxu0 0.0
    %1447 = vmatprep.subr.mxu0 0.0
    %1448 = vmatpush2.msra.mxu0 0.0
    %1449 = vmatprep.subr.mxu0 0.0
    %1450 = vmatpush2.msra.mxu0 0.0
    %1451 = vmatprep.subr.mxu0 0.0
    %1452 = vmatpush2.msra.mxu0 0.0
    %1453 = vmatprep.subr.mxu0 0.0
    %1454 = vmatpush2.msra.mxu0 0.0
    %1455 = vmatprep.subr.mxu0 0.0
    %1456 = vmatpush2.msra.mxu0 0.0
    %1457 = vmatprep.subr.mxu0 0.0
    %1458 = vmatpush2.msra.mxu0 0.0
    %1459 = vmatprep.subr.mxu0 0.0
    %1460 = vmatpush2.msra.mxu0 0.0
    %1461 = vmatprep.subr.mxu0 0.0
    %1462 = vmatpush2.msra.mxu0 0.0
    %1463 = vmatprep.subr.mxu0 0.0
    %1464 = vmatpush2.msra.mxu0 0.0
    %1465 = vmatprep.subr.mxu0 0.0
    %1466 = vmatpush2.msra.mxu0 0.0
    %1467 = vmatprep.subr.mxu0 0.0
    %1468 = vmatpush2.msra.mxu0 0.0
    %1469 = vmatprep.subr.mxu0 0.0
    %1470 = vmatpush2.msra.mxu0 0.0
    %1471 = vmatprep.subr.mxu0 0.0
    %1472 = vmatpush2.msra.mxu0 0.0
    %1473 = vmatprep.subr.mxu0 0.0
    %1474 = vmatpush2.msra.mxu0 0.0
    %1475 = vmatprep.subr.mxu0 0.0
    %1476 = vmatpush2.msra.mxu0 0.0
    %1477 = vmatprep.mubr.f32.mxu0 0.0
    %1478 = vmatmul.mubr.f32.gmra.mxu0 %v1320
    %v1479 = vpop.f32.mrf.mxu0
    %v1480 = vadd.f32 0.0, %v1479
    %v1481 = vpop.f32.mrf.mxu0
    %v1482 = vadd.f32 0.0, %v1481
    %1483 = vmatprep.mubr.f32.mxu0 0.0
    %1484 = vmatmul.mubr.f32.gmra.mxu0 %v1321
    %v1485 = vpop.f32.mrf.mxu0
    %v1486 = vadd.f32 0.0, %v1485
    %v1487 = vpop.f32.mrf.mxu0
    %v1488 = vadd.f32 0.0, %v1487
    %1489 = vmatprep.mubr.f32.mxu0 0.0
    %1490 = vmatmul.mubr.f32.gmra.mxu0 %v1322
    %v1491 = vpop.f32.mrf.mxu0
    %v1492 = vadd.f32 0.0, %v1491
    %v1493 = vpop.f32.mrf.mxu0
    %v1494 = vadd.f32 0.0, %v1493
    %1495 = vmatprep.mubr.f32.mxu0 0.0
    %1496 = vmatmul.mubr.f32.gmra.mxu0 %v1323
    %v1497 = vpop.f32.mrf.mxu0
    %v1498 = vadd.f32 0.0, %v1497
    %v1499 = vpop.f32.mrf.mxu0
    %v1500 = vadd.f32 0.0, %v1499
    %1501 = vdwg.mxu0
    %1502 = vmatprep.subr.mxu0 0.0
    %1503 = vmatpush1.msra.mxu0 %v168
    %1504 = vmatprep.subr.mxu0 0.0
    %1505 = vmatpush1.msra.mxu0 %v163
    %1506 = vmatprep.subr.mxu0 0.0
    %1507 = vmatpush1.msra.mxu0 %v158
    %1508 = vmatprep.subr.mxu0 0.0
    %1509 = vmatpush1.msra.mxu0 %v153
    %1510 = vmatprep.subr.mxu0 0.0
    %1511 = vmatpush1.msra.mxu0 %v148
    %1512 = vmatprep.subr.mxu0 0.0
    %1513 = vmatpush1.msra.mxu0 %v143
    %1514 = vmatprep.subr.mxu0 0.0
    %1515 = vmatpush1.msra.mxu0 %v138
    %1516 = vmatprep.subr.mxu0 0.0
    %1517 = vmatpush1.msra.mxu0 %v133
    %1518 = vmatprep.subr.mxu0 0.0
    %1519 = vmatpush1.msra.mxu0 %v128
    %1520 = vmatprep.subr.mxu0 0.0
    %1521 = vmatpush1.msra.mxu0 %v123
    %1522 = vmatprep.subr.mxu0 0.0
    %1523 = vmatpush1.msra.mxu0 %v118
    %1524 = vmatprep.subr.mxu0 0.0
    %1525 = vmatpush1.msra.mxu0 %v113
    %1526 = vmatprep.subr.mxu0 0.0
    %1527 = vmatpush1.msra.mxu0 %v108
    %1528 = vmatprep.subr.mxu0 0.0
    %1529 = vmatpush1.msra.mxu0 %v103
    %1530 = vmatprep.subr.mxu0 0.0
    %1531 = vmatpush1.msra.mxu0 %v98
    %1532 = vmatprep.subr.mxu0 0.0
    %1533 = vmatpush1.msra.mxu0 %v93
    %1534 = vmatprep.subr.mxu0 0.0
    %1535 = vmatpush2.msra.mxu0 0.0
    %1536 = vmatprep.subr.mxu0 0.0
    %1537 = vmatpush2.msra.mxu0 0.0
    %1538 = vmatprep.subr.mxu0 0.0
    %1539 = vmatpush2.msra.mxu0 0.0
    %1540 = vmatprep.subr.mxu0 0.0
    %1541 = vmatpush2.msra.mxu0 0.0
    %1542 = vmatprep.subr.mxu0 0.0
    %1543 = vmatpush2.msra.mxu0 0.0
    %1544 = vmatprep.subr.mxu0 0.0
    %1545 = vmatpush2.msra.mxu0 0.0
    %1546 = vmatprep.subr.mxu0 0.0
    %1547 = vmatpush2.msra.mxu0 0.0
    %1548 = vmatprep.subr.mxu0 0.0
    %1549 = vmatpush2.msra.mxu0 0.0
    %1550 = vmatprep.subr.mxu0 0.0
    %1551 = vmatpush2.msra.mxu0 0.0
    %1552 = vmatprep.subr.mxu0 0.0
    %1553 = vmatpush2.msra.mxu0 0.0
    %1554 = vmatprep.subr.mxu0 0.0
    %1555 = vmatpush2.msra.mxu0 0.0
    %1556 = vmatprep.subr.mxu0 0.0
    %1557 = vmatpush2.msra.mxu0 0.0
    %1558 = vmatprep.subr.mxu0 0.0
    %1559 = vmatpush2.msra.mxu0 0.0
    %1560 = vmatprep.subr.mxu0 0.0
    %1561 = vmatpush2.msra.mxu0 0.0
    %1562 = vmatprep.subr.mxu0 0.0
    %1563 = vmatpush2.msra.mxu0 0.0
    %1564 = vmatprep.subr.mxu0 0.0
    %1565 = vmatpush2.msra.mxu0 0.0
    %1566 = vmatprep.mubr.f32.mxu0 0.0
    %1567 = vmatmul.mubr.f32.gmra.mxu0 %v1320
    %v1568 = vpop.f32.mrf.mxu0
    %v1569 = vadd.f32 0.0, %v1568
    %v1570 = vpop.f32.mrf.mxu0
    %1571 = vmatprep.mubr.f32.mxu0 0.0
    %1572 = vmatmul.mubr.f32.gmra.mxu0 %v1321
    %v1573 = vpop.f32.mrf.mxu0
    %v1574 = vadd.f32 0.0, %v1573
    %v1575 = vpop.f32.mrf.mxu0
    %1576 = vmatprep.mubr.f32.mxu0 0.0
    %1577 = vmatmul.mubr.f32.gmra.mxu0 %v1322
    %v1578 = vpop.f32.mrf.mxu0
    %v1579 = vadd.f32 0.0, %v1578
    %v1580 = vpop.f32.mrf.mxu0
    %1581 = vmatprep.mubr.f32.mxu0 0.0
    %1582 = vmatmul.mubr.f32.gmra.mxu0 %v1323
    %v1583 = vpop.f32.mrf.mxu0
    %v1584 = vadd.f32 0.0, %v1583
    %v1585 = vpop.f32.mrf.mxu0
    %1586 = vdwg.mxu0
    %1587 = vmatprep.subr.mxu0 0.0
    %1588 = vmatpush1.msra.mxu0 0.0
    %1589 = vmatprep.subr.mxu0 0.0
    %1590 = vmatpush1.msra.mxu0 0.0
    %1591 = vmatprep.subr.mxu0 0.0
    %1592 = vmatpush1.msra.mxu0 0.0
    %1593 = vmatprep.subr.mxu0 0.0
    %1594 = vmatpush1.msra.mxu0 0.0
    %1595 = vmatprep.subr.mxu0 0.0
    %1596 = vmatpush1.msra.mxu0 0.0
    %1597 = vmatprep.subr.mxu0 0.0
    %1598 = vmatpush1.msra.mxu0 0.0
    %1599 = vmatprep.subr.mxu0 0.0
    %1600 = vmatpush1.msra.mxu0 0.0
    %1601 = vmatprep.subr.mxu0 0.0
    %1602 = vmatpush1.msra.mxu0 0.0
    %1603 = vmatprep.subr.mxu0 0.0
    %1604 = vmatpush1.msra.mxu0 0.0
    %1605 = vmatprep.subr.mxu0 0.0
    %1606 = vmatpush1.msra.mxu0 0.0
    %1607 = vmatprep.subr.mxu0 0.0
    %1608 = vmatpush1.msra.mxu0 0.0
    %1609 = vmatprep.subr.mxu0 0.0
    %1610 = vmatpush1.msra.mxu0 0.0
    %1611 = vmatprep.subr.mxu0 0.0
    %1612 = vmatpush1.msra.mxu0 0.0
    %1613 = vmatprep.subr.mxu0 0.0
    %1614 = vmatpush1.msra.mxu0 0.0
    %1615 = vmatprep.subr.mxu0 0.0
    %1616 = vmatpush1.msra.mxu0 0.0
    %1617 = vmatprep.subr.mxu0 %v1393
    %1618 = vmatpush1.msra.mxu0 %v1391
    %1619 = vmatprep.subr.mxu0 0.0
    %1620 = vmatpush2.msra.mxu0 0.0
    %1621 = vmatprep.subr.mxu0 0.0
    %1622 = vmatpush2.msra.mxu0 0.0
    %1623 = vmatprep.subr.mxu0 0.0
    %1624 = vmatpush2.msra.mxu0 0.0
    %1625 = vmatprep.subr.mxu0 0.0
    %1626 = vmatpush2.msra.mxu0 0.0
    %1627 = vmatprep.subr.mxu0 0.0
    %1628 = vmatpush2.msra.mxu0 0.0
    %1629 = vmatprep.subr.mxu0 0.0
    %1630 = vmatpush2.msra.mxu0 0.0
    %1631 = vmatprep.subr.mxu0 0.0
    %1632 = vmatpush2.msra.mxu0 0.0
    %1633 = vmatprep.subr.mxu0 0.0
    %1634 = vmatpush2.msra.mxu0 0.0
    %1635 = vmatprep.subr.mxu0 0.0
    %1636 = vmatpush2.msra.mxu0 0.0
    %1637 = vmatprep.subr.mxu0 0.0
    %1638 = vmatpush2.msra.mxu0 0.0
    %1639 = vmatprep.subr.mxu0 0.0
    %1640 = vmatpush2.msra.mxu0 0.0
    %1641 = vmatprep.subr.mxu0 0.0
    %1642 = vmatpush2.msra.mxu0 0.0
    %1643 = vmatprep.subr.mxu0 0.0
    %1644 = vmatpush2.msra.mxu0 0.0
    %1645 = vmatprep.subr.mxu0 0.0
    %1646 = vmatpush2.msra.mxu0 0.0
    %1647 = vmatprep.subr.mxu0 0.0
    %1648 = vmatpush2.msra.mxu0 0.0
    %1649 = vmatprep.subr.mxu0 0.0
    %1650 = vmatpush2.msra.mxu0 0.0
    %1651 = vmatprep.mubr.f32.mxu0 0.0
    %1652 = vmatmul.mubr.f32.gmra.mxu0 %v580
    %v1653 = vpop.f32.mrf.mxu0
    %v1654 = vadd.f32 0.0, %v1653
    %v1655 = vpop.f32.mrf.mxu0
    %v1656 = vadd.f32 0.0, %v1655
    %1657 = vdwg.mxu0
    %1658 = vmatprep.subr.mxu0 0.0
    %1659 = vmatpush1.msra.mxu0 0.0
    %1660 = vmatprep.subr.mxu0 0.0
    %1661 = vmatpush1.msra.mxu0 0.0
    %1662 = vmatprep.subr.mxu0 0.0
    %1663 = vmatpush1.msra.mxu0 0.0
    %1664 = vmatprep.subr.mxu0 0.0
    %1665 = vmatpush1.msra.mxu0 0.0
    %1666 = vmatprep.subr.mxu0 0.0
    %1667 = vmatpush1.msra.mxu0 0.0
    %1668 = vmatprep.subr.mxu0 0.0
    %1669 = vmatpush1.msra.mxu0 0.0
    %1670 = vmatprep.subr.mxu0 0.0
    %1671 = vmatpush1.msra.mxu0 0.0
    %1672 = vmatprep.subr.mxu0 0.0
    %1673 = vmatpush1.msra.mxu0 0.0
    %1674 = vmatprep.subr.mxu0 0.0
    %1675 = vmatpush1.msra.mxu0 0.0
    %1676 = vmatprep.subr.mxu0 0.0
    %1677 = vmatpush1.msra.mxu0 0.0
    %1678 = vmatprep.subr.mxu0 0.0
    %1679 = vmatpush1.msra.mxu0 0.0
    %1680 = vmatprep.subr.mxu0 0.0
    %1681 = vmatpush1.msra.mxu0 0.0
    %1682 = vmatprep.subr.mxu0 0.0
    %1683 = vmatpush1.msra.mxu0 0.0
    %1684 = vmatprep.subr.mxu0 0.0
    %1685 = vmatpush1.msra.mxu0 0.0
    %1686 = vmatprep.subr.mxu0 0.0
    %1687 = vmatpush1.msra.mxu0 0.0
    %1688 = vmatprep.subr.mxu0 0.0
    %1689 = vmatpush1.msra.mxu0 %v1480
    %1690 = vmatprep.subr.mxu0 0.0
    %1691 = vmatpush2.msra.mxu0 0.0
    %1692 = vmatprep.subr.mxu0 0.0
    %1693 = vmatpush2.msra.mxu0 0.0
    %1694 = vmatprep.subr.mxu0 0.0
    %1695 = vmatpush2.msra.mxu0 0.0
    %1696 = vmatprep.subr.mxu0 0.0
    %1697 = vmatpush2.msra.mxu0 0.0
    %1698 = vmatprep.subr.mxu0 0.0
    %1699 = vmatpush2.msra.mxu0 0.0
    %1700 = vmatprep.subr.mxu0 0.0
    %1701 = vmatpush2.msra.mxu0 0.0
    %1702 = vmatprep.subr.mxu0 0.0
    %1703 = vmatpush2.msra.mxu0 0.0
    %1704 = vmatprep.subr.mxu0 0.0
    %1705 = vmatpush2.msra.mxu0 0.0
    %1706 = vmatprep.subr.mxu0 0.0
    %1707 = vmatpush2.msra.mxu0 0.0
    %1708 = vmatprep.subr.mxu0 0.0
    %1709 = vmatpush2.msra.mxu0 0.0
    %1710 = vmatprep.subr.mxu0 0.0
    %1711 = vmatpush2.msra.mxu0 0.0
    %1712 = vmatprep.subr.mxu0 0.0
    %1713 = vmatpush2.msra.mxu0 0.0
    %1714 = vmatprep.subr.mxu0 0.0
    %1715 = vmatpush2.msra.mxu0 0.0
    %1716 = vmatprep.subr.mxu0 0.0
    %1717 = vmatpush2.msra.mxu0 0.0
    %1718 = vmatprep.subr.mxu0 0.0
    %1719 = vmatpush2.msra.mxu0 0.0
    %1720 = vmatprep.subr.mxu0 0.0
    %1721 = vmatpush2.msra.mxu0 0.0
    %1722 = vmatprep.mubr.f32.mxu0 0.0
    %1723 = vmatmul.mubr.f32.gmra.mxu0 %v580
    %v1724 = vpop.f32.mrf.mxu0
    %v1725 = vadd.f32 0.0, %v1724
    %v1726 = vpop.f32.mrf.mxu0
    %1727 = vdwg.mxu0
    %1728 = vmatprep.subr.mxu0 0.0
    %1729 = vmatpush1.msra.mxu0 0.0
    %1730 = vmatprep.subr.mxu0 0.0
    %1731 = vmatpush1.msra.mxu0 0.0
    %1732 = vmatprep.subr.mxu0 0.0
    %1733 = vmatpush1.msra.mxu0 0.0
    %1734 = vmatprep.subr.mxu0 0.0
    %1735 = vmatpush1.msra.mxu0 0.0
    %1736 = vmatprep.subr.mxu0 0.0
    %1737 = vmatpush1.msra.mxu0 0.0
    %1738 = vmatprep.subr.mxu0 0.0
    %1739 = vmatpush1.msra.mxu0 0.0
    %1740 = vmatprep.subr.mxu0 0.0
    %1741 = vmatpush1.msra.mxu0 0.0
    %1742 = vmatprep.subr.mxu0 0.0
    %1743 = vmatpush1.msra.mxu0 0.0
    %1744 = vmatprep.subr.mxu0 0.0
    %1745 = vmatpush1.msra.mxu0 0.0
    %1746 = vmatprep.subr.mxu0 0.0
    %1747 = vmatpush1.msra.mxu0 0.0
    %1748 = vmatprep.subr.mxu0 0.0
    %1749 = vmatpush1.msra.mxu0 0.0
    %1750 = vmatprep.subr.mxu0 0.0
    %1751 = vmatpush1.msra.mxu0 0.0
    %1752 = vmatprep.subr.mxu0 0.0
    %1753 = vmatpush1.msra.mxu0 0.0
    %1754 = vmatprep.subr.mxu0 0.0
    %1755 = vmatpush1.msra.mxu0 0.0
    %1756 = vmatprep.subr.mxu0 0.0
    %1757 = vmatpush1.msra.mxu0 0.0
    %1758 = vmatprep.subr.mxu0 %v1399
    %1759 = vmatpush1.msra.mxu0 %v1397
    %1760 = vmatprep.subr.mxu0 0.0
    %1761 = vmatpush2.msra.mxu0 0.0
    %1762 = vmatprep.subr.mxu0 0.0
    %1763 = vmatpush2.msra.mxu0 0.0
    %1764 = vmatprep.subr.mxu0 0.0
    %1765 = vmatpush2.msra.mxu0 0.0
    %1766 = vmatprep.subr.mxu0 0.0
    %1767 = vmatpush2.msra.mxu0 0.0
    %1768 = vmatprep.subr.mxu0 0.0
    %1769 = vmatpush2.msra.mxu0 0.0
    %1770 = vmatprep.subr.mxu0 0.0
    %1771 = vmatpush2.msra.mxu0 0.0
    %1772 = vmatprep.subr.mxu0 0.0
    %1773 = vmatpush2.msra.mxu0 0.0
    %1774 = vmatprep.subr.mxu0 0.0
    %1775 = vmatpush2.msra.mxu0 0.0
    %1776 = vmatprep.subr.mxu0 0.0
    %1777 = vmatpush2.msra.mxu0 0.0
    %1778 = vmatprep.subr.mxu0 0.0
    %1779 = vmatpush2.msra.mxu0 0.0
    %1780 = vmatprep.subr.mxu0 0.0
    %1781 = vmatpush2.msra.mxu0 0.0
    %1782 = vmatprep.subr.mxu0 0.0
    %1783 = vmatpush2.msra.mxu0 0.0
    %1784 = vmatprep.subr.mxu0 0.0
    %1785 = vmatpush2.msra.mxu0 0.0
    %1786 = vmatprep.subr.mxu0 0.0
    %1787 = vmatpush2.msra.mxu0 0.0
    %1788 = vmatprep.subr.mxu0 0.0
    %1789 = vmatpush2.msra.mxu0 0.0
    %1790 = vmatprep.subr.mxu0 0.0
    %1791 = vmatpush2.msra.mxu0 0.0
    %1792 = vmatprep.mubr.f32.mxu0 0.0
    %1793 = vmatmul.mubr.f32.gmra.mxu0 %v724
    %v1794 = vpop.f32.mrf.mxu0
    %v1795 = vadd.f32 0.0, %v1794
    %v1796 = vpop.f32.mrf.mxu0
    %v1797 = vadd.f32 0.0, %v1796
    %1798 = vdwg.mxu0
    %1799 = vmatprep.subr.mxu0 0.0
    %1800 = vmatpush1.msra.mxu0 0.0
    %1801 = vmatprep.subr.mxu0 0.0
    %1802 = vmatpush1.msra.mxu0 0.0
    %1803 = vmatprep.subr.mxu0 0.0
    %1804 = vmatpush1.msra.mxu0 0.0
    %1805 = vmatprep.subr.mxu0 0.0
    %1806 = vmatpush1.msra.mxu0 0.0
    %1807 = vmatprep.subr.mxu0 0.0
    %1808 = vmatpush1.msra.mxu0 0.0
    %1809 = vmatprep.subr.mxu0 0.0
    %1810 = vmatpush1.msra.mxu0 0.0
    %1811 = vmatprep.subr.mxu0 0.0
    %1812 = vmatpush1.msra.mxu0 0.0
    %1813 = vmatprep.subr.mxu0 0.0
    %1814 = vmatpush1.msra.mxu0 0.0
    %1815 = vmatprep.subr.mxu0 0.0
    %1816 = vmatpush1.msra.mxu0 0.0
    %1817 = vmatprep.subr.mxu0 0.0
    %1818 = vmatpush1.msra.mxu0 0.0
    %1819 = vmatprep.subr.mxu0 0.0
    %1820 = vmatpush1.msra.mxu0 0.0
    %1821 = vmatprep.subr.mxu0 0.0
    %1822 = vmatpush1.msra.mxu0 0.0
    %1823 = vmatprep.subr.mxu0 0.0
    %1824 = vmatpush1.msra.mxu0 0.0
    %1825 = vmatprep.subr.mxu0 0.0
    %1826 = vmatpush1.msra.mxu0 0.0
    %1827 = vmatprep.subr.mxu0 0.0
    %1828 = vmatpush1.msra.mxu0 0.0
    %1829 = vmatprep.subr.mxu0 0.0
    %1830 = vmatpush1.msra.mxu0 %v1486
    %1831 = vmatprep.subr.mxu0 0.0
    %1832 = vmatpush2.msra.mxu0 0.0
    %1833 = vmatprep.subr.mxu0 0.0
    %1834 = vmatpush2.msra.mxu0 0.0
    %1835 = vmatprep.subr.mxu0 0.0
    %1836 = vmatpush2.msra.mxu0 0.0
    %1837 = vmatprep.subr.mxu0 0.0
    %1838 = vmatpush2.msra.mxu0 0.0
    %1839 = vmatprep.subr.mxu0 0.0
    %1840 = vmatpush2.msra.mxu0 0.0
    %1841 = vmatprep.subr.mxu0 0.0
    %1842 = vmatpush2.msra.mxu0 0.0
    %1843 = vmatprep.subr.mxu0 0.0
    %1844 = vmatpush2.msra.mxu0 0.0
    %1845 = vmatprep.subr.mxu0 0.0
    %1846 = vmatpush2.msra.mxu0 0.0
    %1847 = vmatprep.subr.mxu0 0.0
    %1848 = vmatpush2.msra.mxu0 0.0
    %1849 = vmatprep.subr.mxu0 0.0
    %1850 = vmatpush2.msra.mxu0 0.0
    %1851 = vmatprep.subr.mxu0 0.0
    %1852 = vmatpush2.msra.mxu0 0.0
    %1853 = vmatprep.subr.mxu0 0.0
    %1854 = vmatpush2.msra.mxu0 0.0
    %1855 = vmatprep.subr.mxu0 0.0
    %1856 = vmatpush2.msra.mxu0 0.0
    %1857 = vmatprep.subr.mxu0 0.0
    %1858 = vmatpush2.msra.mxu0 0.0
    %1859 = vmatprep.subr.mxu0 0.0
    %1860 = vmatpush2.msra.mxu0 0.0
    %1861 = vmatprep.subr.mxu0 0.0
    %1862 = vmatpush2.msra.mxu0 0.0
    %1863 = vmatprep.mubr.f32.mxu0 0.0
    %1864 = vmatmul.mubr.f32.gmra.mxu0 %v724
    %v1865 = vpop.f32.mrf.mxu0
    %v1866 = vadd.f32 0.0, %v1865
    %v1867 = vpop.f32.mrf.mxu0
    %1868 = vdwg.mxu0
    %1869 = vmatprep.subr.mxu0 0.0
    %1870 = vmatpush1.msra.mxu0 0.0
    %1871 = vmatprep.subr.mxu0 0.0
    %1872 = vmatpush1.msra.mxu0 0.0
    %1873 = vmatprep.subr.mxu0 0.0
    %1874 = vmatpush1.msra.mxu0 0.0
    %1875 = vmatprep.subr.mxu0 0.0
    %1876 = vmatpush1.msra.mxu0 0.0
    %1877 = vmatprep.subr.mxu0 0.0
    %1878 = vmatpush1.msra.mxu0 0.0
    %1879 = vmatprep.subr.mxu0 0.0
    %1880 = vmatpush1.msra.mxu0 0.0
    %1881 = vmatprep.subr.mxu0 0.0
    %1882 = vmatpush1.msra.mxu0 0.0
    %1883 = vmatprep.subr.mxu0 0.0
    %1884 = vmatpush1.msra.mxu0 0.0
    %1885 = vmatprep.subr.mxu0 0.0
    %1886 = vmatpush1.msra.mxu0 0.0
    %1887 = vmatprep.subr.mxu0 0.0
    %1888 = vmatpush1.msra.mxu0 0.0
    %1889 = vmatprep.subr.mxu0 0.0
    %1890 = vmatpush1.msra.mxu0 0.0
    %1891 = vmatprep.subr.mxu0 0.0
    %1892 = vmatpush1.msra.mxu0 0.0
    %1893 = vmatprep.subr.mxu0 0.0
    %1894 = vmatpush1.msra.mxu0 0.0
    %1895 = vmatprep.subr.mxu0 0.0
    %1896 = vmatpush1.msra.mxu0 0.0
    %1897 = vmatprep.subr.mxu0 0.0
    %1898 = vmatpush1.msra.mxu0 0.0
    %1899 = vmatprep.subr.mxu0 %v1405
    %1900 = vmatpush1.msra.mxu0 %v1403
    %1901 = vmatprep.subr.mxu0 0.0
    %1902 = vmatpush2.msra.mxu0 0.0
    %1903 = vmatprep.subr.mxu0 0.0
    %1904 = vmatpush2.msra.mxu0 0.0
    %1905 = vmatprep.subr.mxu0 0.0
    %1906 = vmatpush2.msra.mxu0 0.0
    %1907 = vmatprep.subr.mxu0 0.0
    %1908 = vmatpush2.msra.mxu0 0.0
    %1909 = vmatprep.subr.mxu0 0.0
    %1910 = vmatpush2.msra.mxu0 0.0
    %1911 = vmatprep.subr.mxu0 0.0
    %1912 = vmatpush2.msra.mxu0 0.0
    %1913 = vmatprep.subr.mxu0 0.0
    %1914 = vmatpush2.msra.mxu0 0.0
    %1915 = vmatprep.subr.mxu0 0.0
    %1916 = vmatpush2.msra.mxu0 0.0
    %1917 = vmatprep.subr.mxu0 0.0
    %1918 = vmatpush2.msra.mxu0 0.0
    %1919 = vmatprep.subr.mxu0 0.0
    %1920 = vmatpush2.msra.mxu0 0.0
    %1921 = vmatprep.subr.mxu0 0.0
    %1922 = vmatpush2.msra.mxu0 0.0
    %1923 = vmatprep.subr.mxu0 0.0
    %1924 = vmatpush2.msra.mxu0 0.0
    %1925 = vmatprep.subr.mxu0 0.0
    %1926 = vmatpush2.msra.mxu0 0.0
    %1927 = vmatprep.subr.mxu0 0.0
    %1928 = vmatpush2.msra.mxu0 0.0
    %1929 = vmatprep.subr.mxu0 0.0
    %1930 = vmatpush2.msra.mxu0 0.0
    %1931 = vmatprep.subr.mxu0 0.0
    %1932 = vmatpush2.msra.mxu0 0.0
    %1933 = vmatprep.mubr.f32.mxu0 0.0
    %1934 = vmatmul.mubr.f32.gmra.mxu0 %v868
    %v1935 = vpop.f32.mrf.mxu0
    %v1936 = vadd.f32 0.0, %v1935
    %v1937 = vpop.f32.mrf.mxu0
    %v1938 = vadd.f32 0.0, %v1937
    %1939 = vdwg.mxu0
    %1940 = vmatprep.subr.mxu0 0.0
    %1941 = vmatpush1.msra.mxu0 0.0
    %1942 = vmatprep.subr.mxu0 0.0
    %1943 = vmatpush1.msra.mxu0 0.0
    %1944 = vmatprep.subr.mxu0 0.0
    %1945 = vmatpush1.msra.mxu0 0.0
    %1946 = vmatprep.subr.mxu0 0.0
    %1947 = vmatpush1.msra.mxu0 0.0
    %1948 = vmatprep.subr.mxu0 0.0
    %1949 = vmatpush1.msra.mxu0 0.0
    %1950 = vmatprep.subr.mxu0 0.0
    %1951 = vmatpush1.msra.mxu0 0.0
    %1952 = vmatprep.subr.mxu0 0.0
    %1953 = vmatpush1.msra.mxu0 0.0
    %1954 = vmatprep.subr.mxu0 0.0
    %1955 = vmatpush1.msra.mxu0 0.0
    %1956 = vmatprep.subr.mxu0 0.0
    %1957 = vmatpush1.msra.mxu0 0.0
    %1958 = vmatprep.subr.mxu0 0.0
    %1959 = vmatpush1.msra.mxu0 0.0
    %1960 = vmatprep.subr.mxu0 0.0
    %1961 = vmatpush1.msra.mxu0 0.0
    %1962 = vmatprep.subr.mxu0 0.0
    %1963 = vmatpush1.msra.mxu0 0.0
    %1964 = vmatprep.subr.mxu0 0.0
    %1965 = vmatpush1.msra.mxu0 0.0
    %1966 = vmatprep.subr.mxu0 0.0
    %1967 = vmatpush1.msra.mxu0 0.0
    %1968 = vmatprep.subr.mxu0 0.0
    %1969 = vmatpush1.msra.mxu0 0.0
    %1970 = vmatprep.subr.mxu0 0.0
    %1971 = vmatpush1.msra.mxu0 %v1492
    %1972 = vmatprep.subr.mxu0 0.0
    %1973 = vmatpush2.msra.mxu0 0.0
    %1974 = vmatprep.subr.mxu0 0.0
    %1975 = vmatpush2.msra.mxu0 0.0
    %1976 = vmatprep.subr.mxu0 0.0
    %1977 = vmatpush2.msra.mxu0 0.0
    %1978 = vmatprep.subr.mxu0 0.0
    %1979 = vmatpush2.msra.mxu0 0.0
    %1980 = vmatprep.subr.mxu0 0.0
    %1981 = vmatpush2.msra.mxu0 0.0
    %1982 = vmatprep.subr.mxu0 0.0
    %1983 = vmatpush2.msra.mxu0 0.0
    %1984 = vmatprep.subr.mxu0 0.0
    %1985 = vmatpush2.msra.mxu0 0.0
    %1986 = vmatprep.subr.mxu0 0.0
    %1987 = vmatpush2.msra.mxu0 0.0
    %1988 = vmatprep.subr.mxu0 0.0
    %1989 = vmatpush2.msra.mxu0 0.0
    %1990 = vmatprep.subr.mxu0 0.0
    %1991 = vmatpush2.msra.mxu0 0.0
    %1992 = vmatprep.subr.mxu0 0.0
    %1993 = vmatpush2.msra.mxu0 0.0
    %1994 = vmatprep.subr.mxu0 0.0
    %1995 = vmatpush2.msra.mxu0 0.0
    %1996 = vmatprep.subr.mxu0 0.0
    %1997 = vmatpush2.msra.mxu0 0.0
    %1998 = vmatprep.subr.mxu0 0.0
    %1999 = vmatpush2.msra.mxu0 0.0
    %2000 = vmatprep.subr.mxu0 0.0
    %2001 = vmatpush2.msra.mxu0 0.0
    %2002 = vmatprep.subr.mxu0 0.0
    %2003 = vmatpush2.msra.mxu0 0.0
    %2004 = vmatprep.mubr.f32.mxu0 0.0
    %2005 = vmatmul.mubr.f32.gmra.mxu0 %v868
    %v2006 = vpop.f32.mrf.mxu0
    %v2007 = vadd.f32 0.0, %v2006
    %v2008 = vpop.f32.mrf.mxu0
    %2009 = vdwg.mxu0
    %2010 = vmatprep.subr.mxu0 0.0
    %2011 = vmatpush1.msra.mxu0 0.0
    %2012 = vmatprep.subr.mxu0 0.0
    %2013 = vmatpush1.msra.mxu0 0.0
    %2014 = vmatprep.subr.mxu0 0.0
    %2015 = vmatpush1.msra.mxu0 0.0
    %2016 = vmatprep.subr.mxu0 0.0
    %2017 = vmatpush1.msra.mxu0 0.0
    %2018 = vmatprep.subr.mxu0 0.0
    %2019 = vmatpush1.msra.mxu0 0.0
    %2020 = vmatprep.subr.mxu0 0.0
    %2021 = vmatpush1.msra.mxu0 0.0
    %2022 = vmatprep.subr.mxu0 0.0
    %2023 = vmatpush1.msra.mxu0 0.0
    %2024 = vmatprep.subr.mxu0 0.0
    %2025 = vmatpush1.msra.mxu0 0.0
    %2026 = vmatprep.subr.mxu0 0.0
    %2027 = vmatpush1.msra.mxu0 0.0
    %2028 = vmatprep.subr.mxu0 0.0
    %2029 = vmatpush1.msra.mxu0 0.0
    %2030 = vmatprep.subr.mxu0 0.0
    %2031 = vmatpush1.msra.mxu0 0.0
    %2032 = vmatprep.subr.mxu0 0.0
    %2033 = vmatpush1.msra.mxu0 0.0
    %2034 = vmatprep.subr.mxu0 0.0
    %2035 = vmatpush1.msra.mxu0 0.0
    %2036 = vmatprep.subr.mxu0 0.0
    %2037 = vmatpush1.msra.mxu0 0.0
    %2038 = vmatprep.subr.mxu0 0.0
    %2039 = vmatpush1.msra.mxu0 0.0
    %2040 = vmatprep.subr.mxu0 %v1411
    %2041 = vmatpush1.msra.mxu0 %v1409
    %2042 = vmatprep.subr.mxu0 0.0
    %2043 = vmatpush2.msra.mxu0 0.0
    %2044 = vmatprep.subr.mxu0 0.0
    %2045 = vmatpush2.msra.mxu0 0.0
    %2046 = vmatprep.subr.mxu0 0.0
    %2047 = vmatpush2.msra.mxu0 0.0
    %2048 = vmatprep.subr.mxu0 0.0
    %2049 = vmatpush2.msra.mxu0 0.0
    %2050 = vmatprep.subr.mxu0 0.0
    %2051 = vmatpush2.msra.mxu0 0.0
    %2052 = vmatprep.subr.mxu0 0.0
    %2053 = vmatpush2.msra.mxu0 0.0
    %2054 = vmatprep.subr.mxu0 0.0
    %2055 = vmatpush2.msra.mxu0 0.0
    %2056 = vmatprep.subr.mxu0 0.0
    %2057 = vmatpush2.msra.mxu0 0.0
    %2058 = vmatprep.subr.mxu0 0.0
    %2059 = vmatpush2.msra.mxu0 0.0
    %2060 = vmatprep.subr.mxu0 0.0
    %2061 = vmatpush2.msra.mxu0 0.0
    %2062 = vmatprep.subr.mxu0 0.0
    %2063 = vmatpush2.msra.mxu0 0.0
    %2064 = vmatprep.subr.mxu0 0.0
    %2065 = vmatpush2.msra.mxu0 0.0
    %2066 = vmatprep.subr.mxu0 0.0
    %2067 = vmatpush2.msra.mxu0 0.0
    %2068 = vmatprep.subr.mxu0 0.0
    %2069 = vmatpush2.msra.mxu0 0.0
    %2070 = vmatprep.subr.mxu0 0.0
    %2071 = vmatpush2.msra.mxu0 0.0
    %2072 = vmatprep.subr.mxu0 0.0
    %2073 = vmatpush2.msra.mxu0 0.0
    %2074 = vmatprep.mubr.f32.mxu0 0.0
    %2075 = vmatmul.mubr.f32.gmra.mxu0 %v1012
    %v2076 = vpop.f32.mrf.mxu0
    %v2077 = vadd.f32 0.0, %v2076
    %v2078 = vpop.f32.mrf.mxu0
    %v2079 = vadd.f32 0.0, %v2078
    %2080 = vdwg.mxu0
    %2081 = vmatprep.subr.mxu0 0.0
    %2082 = vmatpush1.msra.mxu0 0.0
    %2083 = vmatprep.subr.mxu0 0.0
    %2084 = vmatpush1.msra.mxu0 0.0
    %2085 = vmatprep.subr.mxu0 0.0
    %2086 = vmatpush1.msra.mxu0 0.0
    %2087 = vmatprep.subr.mxu0 0.0
    %2088 = vmatpush1.msra.mxu0 0.0
    %2089 = vmatprep.subr.mxu0 0.0
    %2090 = vmatpush1.msra.mxu0 0.0
    %2091 = vmatprep.subr.mxu0 0.0
    %2092 = vmatpush1.msra.mxu0 0.0
    %2093 = vmatprep.subr.mxu0 0.0
    %2094 = vmatpush1.msra.mxu0 0.0
    %2095 = vmatprep.subr.mxu0 0.0
    %2096 = vmatpush1.msra.mxu0 0.0
    %2097 = vmatprep.subr.mxu0 0.0
    %2098 = vmatpush1.msra.mxu0 0.0
    %2099 = vmatprep.subr.mxu0 0.0
    %2100 = vmatpush1.msra.mxu0 0.0
    %2101 = vmatprep.subr.mxu0 0.0
    %2102 = vmatpush1.msra.mxu0 0.0
    %2103 = vmatprep.subr.mxu0 0.0
    %2104 = vmatpush1.msra.mxu0 0.0
    %2105 = vmatprep.subr.mxu0 0.0
    %2106 = vmatpush1.msra.mxu0 0.0
    %2107 = vmatprep.subr.mxu0 0.0
    %2108 = vmatpush1.msra.mxu0 0.0
    %2109 = vmatprep.subr.mxu0 0.0
    %2110 = vmatpush1.msra.mxu0 0.0
    %2111 = vmatprep.subr.mxu0 0.0
    %2112 = vmatpush1.msra.mxu0 %v1498
    %2113 = vmatprep.subr.mxu0 0.0
    %2114 = vmatpush2.msra.mxu0 0.0
    %2115 = vmatprep.subr.mxu0 0.0
    %2116 = vmatpush2.msra.mxu0 0.0
    %2117 = vmatprep.subr.mxu0 0.0
    %2118 = vmatpush2.msra.mxu0 0.0
    %2119 = vmatprep.subr.mxu0 0.0
    %2120 = vmatpush2.msra.mxu0 0.0
    %2121 = vmatprep.subr.mxu0 0.0
    %2122 = vmatpush2.msra.mxu0 0.0
    %2123 = vmatprep.subr.mxu0 0.0
    %2124 = vmatpush2.msra.mxu0 0.0
    %2125 = vmatprep.subr.mxu0 0.0
    %2126 = vmatpush2.msra.mxu0 0.0
    %2127 = vmatprep.subr.mxu0 0.0
    %2128 = vmatpush2.msra.mxu0 0.0
    %2129 = vmatprep.subr.mxu0 0.0
    %2130 = vmatpush2.msra.mxu0 0.0
    %2131 = vmatprep.subr.mxu0 0.0
    %2132 = vmatpush2.msra.mxu0 0.0
    %2133 = vmatprep.subr.mxu0 0.0
    %2134 = vmatpush2.msra.mxu0 0.0
    %2135 = vmatprep.subr.mxu0 0.0
    %2136 = vmatpush2.msra.mxu0 0.0
    %2137 = vmatprep.subr.mxu0 0.0
    %2138 = vmatpush2.msra.mxu0 0.0
    %2139 = vmatprep.subr.mxu0 0.0
    %2140 = vmatpush2.msra.mxu0 0.0
    %2141 = vmatprep.subr.mxu0 0.0
    %2142 = vmatpush2.msra.mxu0 0.0
    %2143 = vmatprep.subr.mxu0 0.0
    %2144 = vmatpush2.msra.mxu0 0.0
    %2145 = vmatprep.mubr.f32.mxu0 0.0
    %2146 = vmatmul.mubr.f32.gmra.mxu0 %v1012
    %v2147 = vpop.f32.mrf.mxu0
    %v2148 = vadd.f32 0.0, %v2147
    %v2149 = vpop.f32.mrf.mxu0
    %2150 = vdwg.mxu0
    %v2151 = vadd.f32 %v1654, %v1482
    %v2152 = vadd.f32 %v1656, %v1569
    %v2153 = vadd.f32 %v1795, %v1488
    %v2154 = vadd.f32 %v1797, %v1574
    %v2155 = vadd.f32 %v1936, %v1494
    %v2156 = vadd.f32 %v1938, %v1579
    %v2157 = vadd.f32 %v2077, %v1500
    %v2158 = vadd.f32 %v2079, %v1584
    %v2159 = vxor.u32 %v2151, 2147483648
    %v2160 = vxor.u32 %v2152, 2147483648
    %v2161 = vxor.u32 %v2153, 2147483648
    %v2162 = vxor.u32 %v2154, 2147483648
    %v2163 = vxor.u32 %v2155, 2147483648
    %v2164 = vxor.u32 %v2156, 2147483648
    %v2165 = vxor.u32 %v2157, 2147483648
    %v2166 = vxor.u32 %v2158, 2147483648
    %v2167 = vmul.f32 %v2159, 1.442695
    %v2168 = vpow.pop %v2167
    %v2169 = vmul.f32 %v2160, 1.442695
    %v2170 = vpow.pop %v2169
    %v2171 = vmul.f32 %v2161, 1.442695
    %v2172 = vpow.pop %v2171
    %v2173 = vmul.f32 %v2162, 1.442695
    %v2174 = vpow.pop %v2173
    %v2175 = vmul.f32 %v2163, 1.442695
    %v2176 = vpow.pop %v2175
    %v2177 = vmul.f32 %v2164, 1.442695
    %v2178 = vpow.pop %v2177
    %v2179 = vmul.f32 %v2165, 1.442695
    %v2180 = vpow.pop %v2179
    %v2181 = vmul.f32 %v2166, 1.442695
    %v2182 = vpow.pop %v2181
    %v2183 = vadd.f32 %v2168, 1.0
    %v2184 = vadd.f32 %v2170, 1.0
    %v2185 = vadd.f32 %v2172, 1.0
    %v2186 = vadd.f32 %v2174, 1.0
    %v2187 = vadd.f32 %v2176, 1.0
    %v2188 = vadd.f32 %v2178, 1.0
    %v2189 = vadd.f32 %v2180, 1.0
    %v2190 = vadd.f32 %v2182, 1.0
    %v2191 = vrcp.pop %v2183
    %v2192 = vmul.f32 1.0, %v2191
    %v2193 = vrcp.pop %v2184
    %v2194 = vmul.f32 1.0, %v2193
    %v2195 = vrcp.pop %v2185
    %v2196 = vmul.f32 1.0, %v2195
    %v2197 = vrcp.pop %v2186
    %v2198 = vmul.f32 1.0, %v2197
    %v2199 = vrcp.pop %v2187
    %v2200 = vmul.f32 1.0, %v2199
    %v2201 = vrcp.pop %v2188
    %v2202 = vmul.f32 1.0, %v2201
    %v2203 = vrcp.pop %v2189
    %v2204 = vmul.f32 1.0, %v2203
    %v2205 = vrcp.pop %v2190
    %v2206 = vmul.f32 1.0, %v2205
    %v2207 = vmul.f32 %v1320, %v2194
    %v2208 = vmul.f32 %v1321, %v2198
    %v2209 = vmul.f32 %v1322, %v2202
    %v2210 = vmul.f32 %v1323, %v2206
    %2211 = vmatprep.subr.mxu0 0.0
    %2212 = vmatpush1.msra.mxu0 %v184
    %2213 = vmatprep.subr.mxu0 0.0
    %2214 = vmatpush1.msra.mxu0 %v183
    %2215 = vmatprep.subr.mxu0 0.0
    %2216 = vmatpush1.msra.mxu0 %v182
    %2217 = vmatprep.subr.mxu0 0.0
    %2218 = vmatpush1.msra.mxu0 %v181
    %2219 = vmatprep.subr.mxu0 0.0
    %2220 = vmatpush1.msra.mxu0 %v180
    %2221 = vmatprep.subr.mxu0 0.0
    %2222 = vmatpush1.msra.mxu0 %v179
    %2223 = vmatprep.subr.mxu0 0.0
    %2224 = vmatpush1.msra.mxu0 %v178
    %2225 = vmatprep.subr.mxu0 0.0
    %2226 = vmatpush1.msra.mxu0 %v177
    %2227 = vmatprep.subr.mxu0 0.0
    %2228 = vmatpush1.msra.mxu0 %v176
    %2229 = vmatprep.subr.mxu0 0.0
    %2230 = vmatpush1.msra.mxu0 %v175
    %2231 = vmatprep.subr.mxu0 0.0
    %2232 = vmatpush1.msra.mxu0 %v174
    %2233 = vmatprep.subr.mxu0 0.0
    %2234 = vmatpush1.msra.mxu0 %v173
    %2235 = vmatprep.subr.mxu0 0.0
    %2236 = vmatpush1.msra.mxu0 %v172
    %2237 = vmatprep.subr.mxu0 0.0
    %2238 = vmatpush1.msra.mxu0 %v171
    %2239 = vmatprep.subr.mxu0 0.0
    %2240 = vmatpush1.msra.mxu0 %v170
    %2241 = vmatprep.subr.mxu0 0.0
    %2242 = vmatpush1.msra.mxu0 %v169
    %2243 = vmatprep.subr.mxu0 0.0
    %2244 = vmatpush2.msra.mxu0 0.0
    %2245 = vmatprep.subr.mxu0 0.0
    %2246 = vmatpush2.msra.mxu0 0.0
    %2247 = vmatprep.subr.mxu0 0.0
    %2248 = vmatpush2.msra.mxu0 0.0
    %2249 = vmatprep.subr.mxu0 0.0
    %2250 = vmatpush2.msra.mxu0 0.0
    %2251 = vmatprep.subr.mxu0 0.0
    %2252 = vmatpush2.msra.mxu0 0.0
    %2253 = vmatprep.subr.mxu0 0.0
    %2254 = vmatpush2.msra.mxu0 0.0
    %2255 = vmatprep.subr.mxu0 0.0
    %2256 = vmatpush2.msra.mxu0 0.0
    %2257 = vmatprep.subr.mxu0 0.0
    %2258 = vmatpush2.msra.mxu0 0.0
    %2259 = vmatprep.subr.mxu0 0.0
    %2260 = vmatpush2.msra.mxu0 0.0
    %2261 = vmatprep.subr.mxu0 0.0
    %2262 = vmatpush2.msra.mxu0 0.0
    %2263 = vmatprep.subr.mxu0 0.0
    %2264 = vmatpush2.msra.mxu0 0.0
    %2265 = vmatprep.subr.mxu0 0.0
    %2266 = vmatpush2.msra.mxu0 0.0
    %2267 = vmatprep.subr.mxu0 0.0
    %2268 = vmatpush2.msra.mxu0 0.0
    %2269 = vmatprep.subr.mxu0 0.0
    %2270 = vmatpush2.msra.mxu0 0.0
    %2271 = vmatprep.subr.mxu0 0.0
    %2272 = vmatpush2.msra.mxu0 0.0
    %2273 = vmatprep.subr.mxu0 0.0
    %2274 = vmatpush2.msra.mxu0 0.0
    %2275 = vmatprep.mubr.f32.mxu0 0.0
    %2276 = vmatmul.mubr.f32.gmra.mxu0 %v2207
    %v2277 = vpop.f32.mrf.mxu0
    %v2278 = vadd.f32 0.0, %v2277
    %v2279 = vpop.f32.mrf.mxu0
    %2280 = vmatprep.mubr.f32.mxu0 0.0
    %2281 = vmatmul.mubr.f32.gmra.mxu0 %v2208
    %v2282 = vpop.f32.mrf.mxu0
    %v2283 = vadd.f32 0.0, %v2282
    %v2284 = vpop.f32.mrf.mxu0
    %2285 = vmatprep.mubr.f32.mxu0 0.0
    %2286 = vmatmul.mubr.f32.gmra.mxu0 %v2209
    %v2287 = vpop.f32.mrf.mxu0
    %v2288 = vadd.f32 0.0, %v2287
    %v2289 = vpop.f32.mrf.mxu0
    %2290 = vmatprep.mubr.f32.mxu0 0.0
    %2291 = vmatmul.mubr.f32.gmra.mxu0 %v2210
    %v2292 = vpop.f32.mrf.mxu0
    %v2293 = vadd.f32 0.0, %v2292
    %v2294 = vpop.f32.mrf.mxu0
    %2295 = vdwg.mxu0
    %v2296 = vadd.f32 %v1725, %v2278
    %v2297 = vadd.f32 %v1866, %v2283
    %v2298 = vadd.f32 %v2007, %v2288
    %v2299 = vadd.f32 %v2148, %v2293
    %v2300 = vmul.f32 %v192, %v2296
    %v2301 = vmul.f32 %v197, %v2297
    %v2302 = vmul.f32 %v202, %v2298
    %v2303 = vmul.f32 %v207, %v2299
    %v2304 = vmax.f32 %v2300, 0.0
    %v2305 = vmax.f32 %v2301, 0.0
    %v2306 = vmax.f32 %v2302, 0.0
    %v2307 = vmax.f32 %v2303, 0.0
    %v2308 = vsub.f32 %v2304, %v1320
    %v2309 = vsub.f32 %v2305, %v1321
    %v2310 = vsub.f32 %v2306, %v1322
    %v2311 = vsub.f32 %v2307, %v1323
    %v2312 = vmul.f32 %v2192, %v2308
    %v2313 = vmul.f32 %v2196, %v2309
    %v2314 = vmul.f32 %v2200, %v2310
    %v2315 = vmul.f32 %v2204, %v2311
    %v2316 = vadd.f32 %v1320, %v2312
    %v2317 = vadd.f32 %v1321, %v2313
    %v2318 = vadd.f32 %v1322, %v2314
    %v2319 = vadd.f32 %v1323, %v2315
    %2320 = vst [vmem:[#allocation10] sm:$0xff] %v2316
    %2321 = vst [vmem:[#allocation10 + $0x8] sm:$0xff] %v2317
    %2322 = vst [vmem:[#allocation10 + $0x10] sm:$0xff] %v2318
    %2323 = vst [vmem:[#allocation10 + $0x18] sm:$0xff] %v2319
    // Predicated region
    $region42: #{tpu_custom_call.1} parent=1 // pred_check
      _
    $region43: #{tpu_custom_call.1} parent=1 // pred_check_branch
      %2325 = sbr.rel (0) target = $region45
    $region44: #{tpu_custom_call.1} parent=1 // pred_region
      %s2327 = ssub.s32 512, 512
      %2328 = vsyncadd [#allocation4], %s2327
      %s2329 = sshll.u32 [#allocation10], 4
      %s2330 = int_to_ptr.vmem [resolvable:$true] %s2329
      %2335 = dma.vmem_to_hbm [thread:$0]  %s2330, 512, %s6, [#allocation4], 128, 128, 8
    $region45: #{tpu_custom_call.1} parent=1 // pred_fallthru
      _
    // Predicated region
    $region46: #{tpu_custom_call.1} parent=1 // pred_check
      _
    $region47: #{tpu_custom_call.1} parent=1 // pred_check_branch
      %2337 = sbr.rel (0) target = $region49
    $region48: #{tpu_custom_call.1} parent=1 // pred_region
      %2338 = dma.done [#allocation4], 512
    $region49: #{tpu_custom_call.1} parent=1 // pred_fallthru
      _
    %2339 = vsyncpa [#allocation3], 1
    %2340 = vsyncpa [#allocation6], 1
    %2341 = vsyncpa [#allocation9], 1
    %2342 = vsyncpa [#allocation4], 1

</llo_original>
